<compile_context>
chip_gen: v6e
topology: v6e:2x2x1
jax: 0.10.0
libtpu: 0.0.40
codegen_flags: <defaults>
</compile_context>

<pallas_src>
from functools import partial

import jax
import jax.numpy as jnp
from jax.experimental import pallas as pl
from jax.experimental.pallas import tpu as pltpu

CIFAR10_MEAN = (0.4914, 0.4822, 0.4465)   # standard companion mean (deterministic)
CIFAR10_STD = (0.2471, 0.2435, 0.2616)    # from the reference file

_LANE = 128
_SUBLANE = 8
_VMEM_BUDGET = 40 * 1024 * 1024  # conservative tile budget; leaves headroom on v7x (64 MiB/TC)


def _round_up(x, m):
    return ((x + m - 1) // m) * m


# ---------------------------------------------------------------------------
# Kernels
# ---------------------------------------------------------------------------
def _kernel_logits(x_ref, w1_ref, b1_ref, w2_ref, b2_ref, out_ref):
    # InputNormalize: clamp to [0, 1]; the (x - mean)/std affine is folded
    # into w1/b1 on the host, so only the clamp remains in-kernel.
    xc = jnp.clip(x_ref[...], 0.0, 1.0).astype(w1_ref.dtype)
    pre = jnp.dot(xc, w1_ref[...], preferred_element_type=jnp.float32) + b1_ref[...]
    post = jnp.maximum(pre, 0.0)  # fake_relu forward == relu
    out_ref[...] = (
        jnp.dot(post.astype(w2_ref.dtype), w2_ref[...],
                preferred_element_type=jnp.float32) + b2_ref[...]
    )


def _make_kernel_with_latent(latent_is_pre):
    def kernel(x_ref, w1_ref, b1_ref, w2_ref, b2_ref, out_ref, lat_ref):
        xc = jnp.clip(x_ref[...], 0.0, 1.0).astype(w1_ref.dtype)
        pre = jnp.dot(xc, w1_ref[...], preferred_element_type=jnp.float32) + b1_ref[...]
        post = jnp.maximum(pre, 0.0)
        lat = pre if latent_is_pre else post
        lat_ref[...] = lat.astype(lat_ref.dtype)
        out_ref[...] = (
            jnp.dot(post.astype(w2_ref.dtype), w2_ref[...],
                    preferred_element_type=jnp.float32) + b2_ref[...]
        )
    return kernel


# ---------------------------------------------------------------------------
# Tile / VMEM sizing
# ---------------------------------------------------------------------------
def _choose_tm(n, d, h, kp, x_bpe, w_bpe, lat_bpe, want_latent):
    # Sublane granularity of the batch axis depends on the x element size
    # (f32 -> 8, bf16 -> 16) so edge/block shapes stay layout-legal.
    sub = _SUBLANE * max(1, 4 // x_bpe)
    weight_bytes = (d * h + h * kp) * w_bpe + (h + kp) * 4  # single-buffered

    def tile_bytes(tm):
        b = 2 * tm * d * x_bpe          # x tile, double-buffered
        b += 2 * tm * kp * 4            # logits (f32), double-buffered
        b += 2 * tm * h * 4             # pre/post activations (compute scratch)
        if want_latent:
            b += 2 * tm * h * lat_bpe   # latent output, double-buffered
        return b

    tm_cap = sub
    for cand in (512, 384, 256, 128, 64, 32, 16, 8):
        if cand >= sub and cand % sub == 0 and weight_bytes + tile_bytes(cand) <= _VMEM_BUDGET:
            tm_cap = cand
            break

    if n <= sub:
        return sub
    # Prefer >= 2 grid steps so the "parallel" batch axis can be split across
    # both v7x TensorCores (and to overlap DMA/compute on all generations).
    tm_two = _round_up(pl.cdiv(n, 2), sub)
    return max(sub, min(tm_cap, tm_two))


# ---------------------------------------------------------------------------
# pallas_call builder (all shapes static at trace time)
# ---------------------------------------------------------------------------
def _build_call(n, d, h, kp, tm, want_latent, latent_is_pre, latent_dtype,
                buffered_weights, vmem_limit):
    grid = (pl.cdiv(n, tm),)

    def resident(shape):
        # Weights/biases: constant index_map => VMEM-resident across the grid.
        if buffered_weights:
            return pl.BlockSpec(shape, lambda i: (0, 0), pipeline_mode=pl.Buffered(1))
        return pl.BlockSpec(shape, lambda i: (0, 0))

    in_specs = [
        pl.BlockSpec((tm, d), lambda i: (i, 0)),    # x: tiled over batch
        resident((d, h)),                           # w1
        resident((1, h)),                           # b1
        resident((h, kp)),                          # w2
        resident((1, kp)),                          # b2
    ]
    if want_latent:
        kernel = _make_kernel_with_latent(latent_is_pre)
        out_specs = [
            pl.BlockSpec((tm, kp), lambda i: (i, 0)),
            pl.BlockSpec((tm, h), lambda i: (i, 0)),
        ]
        out_shape = [
            jax.ShapeDtypeStruct((n, kp), jnp.float32),
            jax.ShapeDtypeStruct((n, h), latent_dtype),
        ]
    else:
        kernel = _kernel_logits
        out_specs = pl.BlockSpec((tm, kp), lambda i: (i, 0))
        out_shape = jax.ShapeDtypeStruct((n, kp), jnp.float32)

    return pl.pallas_call(
        kernel,
        grid=grid,
        in_specs=in_specs,
        out_specs=out_specs,
        out_shape=out_shape,
        compiler_params=pltpu.CompilerParams(
            dimension_semantics=("parallel",),      # independent batch axis
            vmem_limit_bytes=vmem_limit,
        ),
    )


@partial(jax.jit, static_argnames=("want_latent", "latent_is_pre", "num_classes",
                                   "latent_dtype", "buffered_weights"))
def _forward_impl(x_nchw, w1, b1, w2, b2, *, want_latent, latent_is_pre,
                  num_classes, latent_dtype, buffered_weights):
    n = x_nchw.shape[0]
    # No .astype(f32): floating inputs (f32 or bf16) are consumed as-is so the
    # dominant HBM read is not inflated by a wrapper-side cast pass.
    x_flat = x_nchw.reshape(n, -1)
    if not jnp.issubdtype(x_flat.dtype, jnp.floating):
        # TODO(synk): uint8 images could be scaled in-kernel instead of cast here.
        x_flat = x_flat.astype(jnp.float32)

    d = x_flat.shape[1]
    h = w1.shape[1]
    kp = w2.shape[1]

    x_bpe = x_flat.dtype.itemsize
    w_bpe = w1.dtype.itemsize
    lat_bpe = jnp.dtype(latent_dtype).itemsize
    tm = _choose_tm(n, d, h, kp, x_bpe, w_bpe, lat_bpe, want_latent)

    weight_bytes = (d * h + h * kp) * w_bpe + (h + kp) * 4
    tile_bytes = (2 * tm * d * x_bpe + 2 * tm * kp * 4 + 2 * tm * h * 4
                  + (2 * tm * h * lat_bpe if want_latent else 0))
    vmem_limit = int(min(max(weight_bytes + tile_bytes + 4 * 2**20, 24 * 2**20),
                         100 * 2**20))

    call = _build_call(n, d, h, kp, tm, want_latent, latent_is_pre, latent_dtype,
                       buffered_weights, vmem_limit)
    if want_latent:
        out, lat = call(x_flat, w1, b1, w2, b2)
        return out[:, :num_classes], lat
    out = call(x_flat, w1, b1, w2, b2)
    return out[:, :num_classes]


# ---------------------------------------------------------------------------
# Module wrapper
# ---------------------------------------------------------------------------
class ModelWithInputNormalizationPallas:
    """JAX/Pallas port of ModelwithInputNormalization (forward only).

    The wrapped `net` in the original code is user-supplied; here it is a
    deterministic 2-layer MLP (Linear -> ReLU -> Linear) whose parameters are
    passed in, so the whole forward runs inside one fused Pallas kernel.
    """

    def __init__(self, params, mean, std, hw,
                 weight_dtype=jnp.bfloat16, latent_dtype=jnp.float32):
        w1, b1, w2, b2 = params
        h_img, w_img = hw
        c = len(mean)
        d, _hid = w1.shape
        assert d == c * h_img * w_img

        mean_flat = jnp.repeat(jnp.asarray(mean, jnp.float32), h_img * w_img)
        std_flat = jnp.repeat(jnp.asarray(std, jnp.float32), h_img * w_img)

        w1 = jnp.asarray(w1, jnp.float32)
        b1 = jnp.asarray(b1, jnp.float32).reshape(1, -1)
        w2 = jnp.asarray(w2, jnp.float32)
        b2 = jnp.asarray(b2, jnp.float32).reshape(1, -1)

        # Fold the InputNormalize affine into layer 1 (clamp stays in-kernel):
        #   (clip(x) - mean)/std @ w1 + b1
        #     == clip(x) @ (w1/std[:,None]) + (b1 - (mean/std) @ w1)
        w1_folded = w1 * (1.0 / std_flat)[:, None]
        b1_folded = b1 - (mean_flat / std_flat)[None, :] @ w1

        # Pad the class dim to a lane-dense multiple of 128 (sliced off later).
        self.num_classes = w2.shape[1]
        kp = _round_up(self.num_classes, _LANE)
        if kp != self.num_classes:
            w2 = jnp.pad(w2, ((0, 0), (0, kp - self.num_classes)))
            b2 = jnp.pad(b2, ((0, 0), (0, kp - self.num_classes)))

        # Weights in weight_dtype (bf16 default: MXU-native, halves the
        # one-time weight DMA; use f32 for closer parity with the torch model).
        # Biases stay f32 and are added to f32-accumulated matmul results.
        self.w1 = w1_folded.astype(weight_dtype)
        self.b1 = b1_folded
        self.w2 = w2.astype(weight_dtype)
        self.b2 = b2
        self.latent_dtype = latent_dtype
        self._use_buffered = True   # single-buffered weight specs (Buffered(1))

    def __call__(self, inp, with_latent=False, fake_relu=False, no_relu=False):
        if no_relu and (not with_latent):
            print("WARNING: 'no_relu' has no visible effect if 'with_latent is False.")
        if no_relu and fake_relu:
            raise ValueError("Options 'no_relu' and 'fake_relu' are exclusive")
        # TODO(synk): fake_relu only changes the backward pass of the original
        # net; the forward is identical to relu, so no special handling here.
        kwargs = dict(want_latent=bool(with_latent), latent_is_pre=bool(no_relu),
                      num_classes=self.num_classes, latent_dtype=self.latent_dtype)
        if self._use_buffered:
            try:
                return _forward_impl(inp, self.w1, self.b1, self.w2, self.b2,
                                     buffered_weights=True, **kwargs)
            except Exception:
                # Fallback for JAX versions where pipeline_mode=pl.Buffered(1)
                # is not accepted on pallas_call input specs.
                self._use_buffered = False
        return _forward_impl(inp, self.w1, self.b1, self.w2, self.b2,
                             buffered_weights=False, **kwargs)


# ---------------------------------------------------------------------------
# Demo / correctness check
# ---------------------------------------------------------------------------
if __name__ == "__main__":
    # Small CIFAR-like shapes: N=2, C=3, H=W=16
    N, C, H_img, W_img = 2, 3, 16, 16
    D = C * H_img * W_img          # 768
    HID = 128
    NUM_CLASSES = 10

    key = jax.random.PRNGKey(0)
    kx, k1, k2, k3, k4 = jax.random.split(key, 5)

    x = jax.random.uniform(kx, (N, C, H_img, W_img), jnp.float32,
                           minval=-0.2, maxval=1.2)  # exercises the clamp

    w1 = jax.random.normal(k1, (D, HID), jnp.float32) * 0.05
    b1 = jax.random.normal(k2, (1, HID), jnp.float32) * 0.01
    w2 = jax.random.normal(k3, (HID, NUM_CLASSES), jnp.float32) * 0.05
    b2 = jax.random.normal(k4, (1, NUM_CLASSES), jnp.float32) * 0.01

    model = ModelWithInputNormalizationPallas(
        (w1, b1, w2, b2), CIFAR10_MEAN, CIFAR10_STD, (H_img, W_img))

    logits = jax.block_until_ready(model(x))

    # Pure-JAX reference of the original (f32) forward semantics:
    # clamp -> (x - mean)/std -> Linear -> ReLU -> Linear.
    xc = jnp.clip(x, 0.0, 1.0)
    mean_r = jnp.asarray(CIFAR10_MEAN, jnp.float32).reshape(1, C, 1, 1)
    std_r = jnp.asarray(CIFAR10_STD, jnp.float32).reshape(1, C, 1, 1)
    xn = ((xc - mean_r) / std_r).reshape(N, -1)
    pre_ref = xn @ w1 + b1
    post_ref = jnp.maximum(pre_ref, 0.0)
    ref = post_ref @ w2 + b2
    # bf16 weights loosen the tolerance slightly relative to the f32 reference.
    assert jnp.allclose(logits, ref, atol=5e-2, rtol=5e-2), "logits mismatch vs reference"

    # f32-weight variant (closer parity path; weights stay VMEM-resident).
    model_f32 = ModelWithInputNormalizationPallas(
        (w1, b1, w2, b2), CIFAR10_MEAN, CIFAR10_STD, (H_img, W_img),
        weight_dtype=jnp.float32)
    logits_f32 = jax.block_until_ready(model_f32(x))
    assert jnp.allclose(logits_f32, ref, atol=5e-2, rtol=5e-2), "f32-weight logits mismatch"

    # Latent paths (post-ReLU and pre-ReLU latents).
    out_post, lat_post = model(x, with_latent=True)
    out_pre, lat_pre = model(x, with_latent=True, no_relu=True)
    jax.block_until_ready((out_post, lat_post, out_pre, lat_pre))

    assert jnp.allclose(lat_post, jnp.maximum(lat_pre, 0.0), atol=1e-5), \
        "post-ReLU latent must equal relu(pre-ReLU latent)"
    assert jnp.allclose(lat_post, post_ref, atol=5e-2, rtol=5e-2), "latent mismatch"
    assert jnp.allclose(out_post, logits, atol=1e-6), "logits differ across variants"

    print("KERNEL_OK")
</pallas_src>

<mosaic_0001>
module attributes {stable_mosaic.version = 11 : i64} {
  func.func @_kernel_logits(%arg0: i32, %arg1: memref<8x768xf32, #tpu.memory_space<vmem>>, %arg2: memref<768x128xbf16, #tpu.memory_space<vmem>>, %arg3: memref<1x128xf32, #tpu.memory_space<vmem>>, %arg4: memref<128x128xbf16, #tpu.memory_space<vmem>>, %arg5: memref<1x128xf32, #tpu.memory_space<vmem>>, %arg6: memref<8x128xf32, #tpu.memory_space<vmem>>) attributes {dimension_semantics = [#tpu.dimension_semantics<parallel>], iteration_bounds = array<i64: 1>, scalar_prefetch = 0 : i64, scratch_operands = 0 : i64, tpu.core_type = #tpu.core_type<tc>, window_params = [{transform_indices = @transform_0, window_bounds = array<i64: 8, 768>}, {pipeline_mode = #tpu.pipeline_mode<synchronous>, transform_indices = @transform_1, window_bounds = array<i64: 768, 128>}, {pipeline_mode = #tpu.pipeline_mode<synchronous>, transform_indices = @transform_2, window_bounds = array<i64: 1, 128>}, {pipeline_mode = #tpu.pipeline_mode<synchronous>, transform_indices = @transform_3, window_bounds = array<i64: 128, 128>}, {pipeline_mode = #tpu.pipeline_mode<synchronous>, transform_indices = @transform_4, window_bounds = array<i64: 1, 128>}, {transform_indices = @transform_5, window_bounds = array<i64: 8, 128>}]} {
    %c0 = arith.constant 0 : index
    %c0_0 = arith.constant 0 : index
    %0 = vector.load %arg1[%c0, %c0_0] : memref<8x768xf32, #tpu.memory_space<vmem>>, vector<8x768xf32>
    %cst = arith.constant 0.000000e+00 : f32
    %cst_1 = arith.constant 1.000000e+00 : f32
    %1 = vector.broadcast %cst : f32 to vector<8x768xf32>
    %2 = arith.maximumf %1, %0 : vector<8x768xf32>
    %3 = vector.broadcast %cst_1 : f32 to vector<8x768xf32>
    %4 = arith.minimumf %3, %2 : vector<8x768xf32>
    %5 = arith.truncf %4 : vector<8x768xf32> to vector<8x768xbf16>
    %c0_2 = arith.constant 0 : index
    %c0_3 = arith.constant 0 : index
    %6 = vector.load %arg2[%c0_2, %c0_3] : memref<768x128xbf16, #tpu.memory_space<vmem>>, vector<768x128xbf16>
    %cst_4 = arith.constant dense<0.000000e+00> : vector<8x128xf32>
    %7 = tpu.matmul %5, %6, %cst_4 {dimension_numbers = #tpu.dot_dimension_numbers<[1], [0], [0], [1], [0, 0, 1, 1], [], []>} : vector<8x768xbf16>, vector<768x128xbf16>, vector<8x128xf32> -> vector<8x128xf32>
    %c0_5 = arith.constant 0 : index
    %c0_6 = arith.constant 0 : index
    %8 = vector.load %arg3[%c0_5, %c0_6] : memref<1x128xf32, #tpu.memory_space<vmem>>, vector<1x128xf32>
    %9 = vector.broadcast %8 : vector<1x128xf32> to vector<8x128xf32>
    %10 = arith.addf %7, %9 : vector<8x128xf32>
    %cst_7 = arith.constant 0.000000e+00 : f32
    %11 = vector.broadcast %cst_7 : f32 to vector<8x128xf32>
    %12 = arith.maximumf %10, %11 : vector<8x128xf32>
    %13 = arith.truncf %12 : vector<8x128xf32> to vector<8x128xbf16>
    %c0_8 = arith.constant 0 : index
    %c0_9 = arith.constant 0 : index
    %14 = vector.load %arg4[%c0_8, %c0_9] : memref<128x128xbf16, #tpu.memory_space<vmem>>, vector<128x128xbf16>
    %cst_10 = arith.constant dense<0.000000e+00> : vector<8x128xf32>
    %15 = tpu.matmul %13, %14, %cst_10 {dimension_numbers = #tpu.dot_dimension_numbers<[1], [0], [0], [1], [0, 0, 1, 1], [], []>} : vector<8x128xbf16>, vector<128x128xbf16>, vector<8x128xf32> -> vector<8x128xf32>
    %c0_11 = arith.constant 0 : index
    %c0_12 = arith.constant 0 : index
    %16 = vector.load %arg5[%c0_11, %c0_12] : memref<1x128xf32, #tpu.memory_space<vmem>>, vector<1x128xf32>
    %17 = vector.broadcast %16 : vector<1x128xf32> to vector<8x128xf32>
    %18 = arith.addf %15, %17 : vector<8x128xf32>
    %c0_13 = arith.constant 0 : index
    %c0_14 = arith.constant 0 : index
    %19 = vector.load %arg6[%c0_13, %c0_14] : memref<8x128xf32, #tpu.memory_space<vmem>>, vector<8x128xf32>
    tpu.vector_store %arg6[%c0_13, %c0_14], %18 {strides = array<i32>} : memref<8x128xf32, #tpu.memory_space<vmem>>, vector<8x128xf32>,
    return
  }
  func.func @transform_0(%arg0: i32) -> (i32, i32) {
    %c0_i32 = arith.constant 0 : i32
    %c0_i32_0 = arith.constant 0 : i32
    return %arg0, %c0_i32 : i32, i32
  }
  func.func @transform_1(%arg0: i32) -> (i32, i32) {
    %c0_i32 = arith.constant 0 : i32
    %c0_i32_0 = arith.constant 0 : i32
    %c0_i32_1 = arith.constant 0 : i32
    return %c0_i32, %c0_i32_0 : i32, i32
  }
  func.func @transform_2(%arg0: i32) -> (i32, i32) {
    %c0_i32 = arith.constant 0 : i32
    %c0_i32_0 = arith.constant 0 : i32
    %c0_i32_1 = arith.constant 0 : i32
    return %c0_i32, %c0_i32_0 : i32, i32
  }
  func.func @transform_3(%arg0: i32) -> (i32, i32) {
    %c0_i32 = arith.constant 0 : i32
    %c0_i32_0 = arith.constant 0 : i32
    %c0_i32_1 = arith.constant 0 : i32
    return %c0_i32, %c0_i32_0 : i32, i32
  }
  func.func @transform_4(%arg0: i32) -> (i32, i32) {
    %c0_i32 = arith.constant 0 : i32
    %c0_i32_0 = arith.constant 0 : i32
    %c0_i32_1 = arith.constant 0 : i32
    return %c0_i32, %c0_i32_0 : i32, i32
  }
  func.func @transform_5(%arg0: i32) -> (i32, i32) {
    %c0_i32 = arith.constant 0 : i32
    %c0_i32_0 = arith.constant 0 : i32
    return %arg0, %c0_i32 : i32, i32
  }
}

module attributes {stable_mosaic.version = 11 : i64} {
  func.func @_kernel_logits(%arg0: i32, %arg1: memref<8x768xf32, #tpu.memory_space<vmem>>, %arg2: memref<768x128xbf16, #tpu.memory_space<vmem>>, %arg3: memref<1x128xf32, #tpu.memory_space<vmem>>, %arg4: memref<128x128xbf16, #tpu.memory_space<vmem>>, %arg5: memref<1x128xf32, #tpu.memory_space<vmem>>, %arg6: memref<8x128xf32, #tpu.memory_space<vmem>>) attributes {dimension_semantics = [#tpu.dimension_semantics<parallel>], iteration_bounds = array<i64: 1>, scalar_prefetch = 0 : i64, scratch_operands = 0 : i64, tpu.core_type = #tpu.core_type<tc>, window_params = [{transform_indices = @transform_0, window_bounds = array<i64: 8, 768>}, {pipeline_mode = #tpu.pipeline_mode<synchronous>, transform_indices = @transform_1, window_bounds = array<i64: 768, 128>}, {pipeline_mode = #tpu.pipeline_mode<synchronous>, transform_indices = @transform_2, window_bounds = array<i64: 1, 128>}, {pipeline_mode = #tpu.pipeline_mode<synchronous>, transform_indices = @transform_3, window_bounds = array<i64: 128, 128>}, {pipeline_mode = #tpu.pipeline_mode<synchronous>, transform_indices = @transform_4, window_bounds = array<i64: 1, 128>}, {transform_indices = @transform_5, window_bounds = array<i64: 8, 128>}]} {
    %c0 = arith.constant 0 : index
    %c0_0 = arith.constant 0 : index
    %0 = vector.load %arg1[%c0, %c0_0] : memref<8x768xf32, #tpu.memory_space<vmem>>, vector<8x768xf32>
    %cst = arith.constant 0.000000e+00 : f32
    %cst_1 = arith.constant 1.000000e+00 : f32
    %1 = vector.broadcast %cst : f32 to vector<8x768xf32>
    %2 = arith.maximumf %1, %0 : vector<8x768xf32>
    %3 = vector.broadcast %cst_1 : f32 to vector<8x768xf32>
    %4 = arith.minimumf %3, %2 : vector<8x768xf32>
    %5 = arith.truncf %4 : vector<8x768xf32> to vector<8x768xbf16>
    %c0_2 = arith.constant 0 : index
    %c0_3 = arith.constant 0 : index
    %6 = vector.load %arg2[%c0_2, %c0_3] : memref<768x128xbf16, #tpu.memory_space<vmem>>, vector<768x128xbf16>
    %cst_4 = arith.constant dense<0.000000e+00> : vector<8x128xf32>
    %7 = tpu.matmul %5, %6, %cst_4 {dimension_numbers = #tpu.dot_dimension_numbers<[1], [0], [0], [1], [0, 0, 1, 1], [], []>} : vector<8x768xbf16>, vector<768x128xbf16>, vector<8x128xf32> -> vector<8x128xf32>
    %c0_5 = arith.constant 0 : index
    %c0_6 = arith.constant 0 : index
    %8 = vector.load %arg3[%c0_5, %c0_6] : memref<1x128xf32, #tpu.memory_space<vmem>>, vector<1x128xf32>
    %9 = vector.broadcast %8 : vector<1x128xf32> to vector<8x128xf32>
    %10 = arith.addf %7, %9 : vector<8x128xf32>
    %cst_7 = arith.constant 0.000000e+00 : f32
    %11 = vector.broadcast %cst_7 : f32 to vector<8x128xf32>
    %12 = arith.maximumf %10, %11 : vector<8x128xf32>
    %13 = arith.truncf %12 : vector<8x128xf32> to vector<8x128xbf16>
    %c0_8 = arith.constant 0 : index
    %c0_9 = arith.constant 0 : index
    %14 = vector.load %arg4[%c0_8, %c0_9] : memref<128x128xbf16, #tpu.memory_space<vmem>>, vector<128x128xbf16>
    %cst_10 = arith.constant dense<0.000000e+00> : vector<8x128xf32>
    %15 = tpu.matmul %13, %14, %cst_10 {dimension_numbers = #tpu.dot_dimension_numbers<[1], [0], [0], [1], [0, 0, 1, 1], [], []>} : vector<8x128xbf16>, vector<128x128xbf16>, vector<8x128xf32> -> vector<8x128xf32>
    %c0_11 = arith.constant 0 : index
    %c0_12 = arith.constant 0 : index
    %16 = vector.load %arg5[%c0_11, %c0_12] : memref<1x128xf32, #tpu.memory_space<vmem>>, vector<1x128xf32>
    %17 = vector.broadcast %16 : vector<1x128xf32> to vector<8x128xf32>
    %18 = arith.addf %15, %17 : vector<8x128xf32>
    %c0_13 = arith.constant 0 : index
    %c0_14 = arith.constant 0 : index
    %19 = vector.load %arg6[%c0_13, %c0_14] : memref<8x128xf32, #tpu.memory_space<vmem>>, vector<8x128xf32>
    tpu.vector_store %arg6[%c0_13, %c0_14], %18 {strides = array<i32>} : memref<8x128xf32, #tpu.memory_space<vmem>>, vector<8x128xf32>,
    return
  }
  func.func @transform_0(%arg0: i32) -> (i32, i32) {
    %c0_i32 = arith.constant 0 : i32
    %c0_i32_0 = arith.constant 0 : i32
    return %arg0, %c0_i32 : i32, i32
  }
  func.func @transform_1(%arg0: i32) -> (i32, i32) {
    %c0_i32 = arith.constant 0 : i32
    %c0_i32_0 = arith.constant 0 : i32
    %c0_i32_1 = arith.constant 0 : i32
    return %c0_i32, %c0_i32_0 : i32, i32
  }
  func.func @transform_2(%arg0: i32) -> (i32, i32) {
    %c0_i32 = arith.constant 0 : i32
    %c0_i32_0 = arith.constant 0 : i32
    %c0_i32_1 = arith.constant 0 : i32
    return %c0_i32, %c0_i32_0 : i32, i32
  }
  func.func @transform_3(%arg0: i32) -> (i32, i32) {
    %c0_i32 = arith.constant 0 : i32
    %c0_i32_0 = arith.constant 0 : i32
    %c0_i32_1 = arith.constant 0 : i32
    return %c0_i32, %c0_i32_0 : i32, i32
  }
  func.func @transform_4(%arg0: i32) -> (i32, i32) {
    %c0_i32 = arith.constant 0 : i32
    %c0_i32_0 = arith.constant 0 : i32
    %c0_i32_1 = arith.constant 0 : i32
    return %c0_i32, %c0_i32_0 : i32, i32
  }
  func.func @transform_5(%arg0: i32) -> (i32, i32) {
    %c0_i32 = arith.constant 0 : i32
    %c0_i32_0 = arith.constant 0 : i32
    return %arg0, %c0_i32 : i32, i32
  }
}

</mosaic_0001>

<llo_original>
// kernel: _forward_impl.1
$region0: #{_forward_impl.1}
  #allocation0 [shape = 'u32[]', space=smem, size = 0x4, offset = 0x4, fixed_abs, tag = 'smem constant byte address 0x4 - core index']
  #allocation1 [shape = 'u32[144,128]{1,0:T(1,128)}', space=vmem, size = 0x12000, scoped, tag = 'internal scratch']
  %s0 = inlined_call_operand.vmem [shape: f32[2,768], index: 0, kind: input, shape index: {}]
  %s1 = inlined_call_operand.hbm [shape: bf16[768,128], index: 1, kind: input, shape index: {}]
  %s2 = inlined_call_operand.vmem [shape: f32[1,128], index: 2, kind: input, shape index: {}]
  %s3 = inlined_call_operand.vmem [shape: bf16[128,128], index: 3, kind: input, shape index: {}]
  %s4 = inlined_call_operand.vmem [shape: f32[1,128], index: 4, kind: input, shape index: {}]
  %s5 = inlined_call_operand.hbm [shape: f32[2,128], index: 5, kind: output, shape index: {}]
  %s6 = sld [smem:[#allocation0]]
  $region34: #{_forward_impl.1} parent=0
    _
  %s8 = ssub.s32 1, %s6
  %s9 = scalar_select 0, %s8, %s6
  $region1: #{_forward_impl.1} parent=0
    #allocation2 [shape = 'u8[196608]{0}', space=vmem, size = 0x30000, scoped, tag = 'input window, operand 1, single buffered']
    #allocation3 [shape = 's32[1]{0}', space=sflag, size = 0x4, scoped, tag = 'scoped memory for _forward_impl.1']
    #allocation4 [shape = 's32[1]{0}', space=sflag, size = 0x4, scoped, tag = 'scoped memory for _forward_impl.1']
    #allocation5 [shape = 'u8[4096]{0}', space=vmem, size = 0x1000, scoped, tag = 'output window, operand 0, single buffered']
    %10 = vsyncpa [#allocation3], 0
    %11 = vsyncpa [#allocation4], 0
    // Predicated region
    $region2: #{_forward_impl.1} parent=1 // pred_check
      _
    $region3: #{_forward_impl.1} parent=1 // pred_check_branch
      %13 = sbr.rel (0) target = $region5
    $region4: #{_forward_impl.1} parent=1 // pred_region
      _
    $region5: #{_forward_impl.1} parent=1 // pred_fallthru
      _
    // Predicated region
    $region6: #{_forward_impl.1} parent=1 // pred_check
      _
    $region7: #{_forward_impl.1} parent=1 // pred_check_branch
      %15 = sbr.rel (0) target = $region9
    $region8: #{_forward_impl.1} parent=1 // pred_region
      %s17 = ssub.s32 6144, 6144
      %18 = vsyncadd [#allocation3], %s17
      %s19 = sshll.u32 [#allocation2], 4
      %s20 = int_to_ptr.vmem [resolvable:$true] %s19
      %25 = dma.hbm_to_vmem [thread:$0]  %s1, 6144, %s20, [#allocation3], 64, 64, 4
    $region9: #{_forward_impl.1} parent=1 // pred_fallthru
      _
    // Predicated region
    $region10: #{_forward_impl.1} parent=1 // pred_check
      _
    $region11: #{_forward_impl.1} parent=1 // pred_check_branch
      %27 = sbr.rel (0) target = $region13
    $region12: #{_forward_impl.1} parent=1 // pred_region
      _
    $region13: #{_forward_impl.1} parent=1 // pred_fallthru
      _
    // Predicated region
    $region14: #{_forward_impl.1} parent=1 // pred_check
      _
    $region15: #{_forward_impl.1} parent=1 // pred_check_branch
      %29 = sbr.rel (0) target = $region17
    $region16: #{_forward_impl.1} parent=1 // pred_region
      _
    $region17: #{_forward_impl.1} parent=1 // pred_fallthru
      _
    // Predicated region
    $region18: #{_forward_impl.1} parent=1 // pred_check
      _
    $region19: #{_forward_impl.1} parent=1 // pred_check_branch
      %31 = sbr.rel (0) target = $region21
    $region20: #{_forward_impl.1} parent=1 // pred_region
      _
    $region21: #{_forward_impl.1} parent=1 // pred_fallthru
      _
    // Predicated region
    $region22: #{_forward_impl.1} parent=1 // pred_check
      _
    $region23: #{_forward_impl.1} parent=1 // pred_check_branch
      %33 = sbr.rel (0) target = $region25
    $region24: #{_forward_impl.1} parent=1 // pred_region
      %34 = dma.done [#allocation3], 6144
    $region25: #{_forward_impl.1} parent=1 // pred_fallthru
      _
    %v36 = vld [vmem:[%s0] sm:$0xff]
    %v37 = vld [vmem:[%s0 + $0x8] sm:$0xf]
    %v38 = vld [vmem:[%s0 + $0xc] sm:$0xff]
    %v39 = vld [vmem:[%s0 + $0x14] sm:$0xf]
    %v40 = vld [vmem:[%s0 + $0x18] sm:$0xff]
    %v41 = vld [vmem:[%s0 + $0x20] sm:$0xf]
    %v42 = vld [vmem:[%s0 + $0x24] sm:$0xff]
    %v43 = vld [vmem:[%s0 + $0x2c] sm:$0xf]
    %v44 = vmax.f32 %v36, 0.0
    %v45 = vmax.f32 %v37, 0.0
    %v46 = vmax.f32 %v38, 0.0
    %v47 = vmax.f32 %v39, 0.0
    %v48 = vmax.f32 %v40, 0.0
    %v49 = vmax.f32 %v41, 0.0
    %v50 = vmax.f32 %v42, 0.0
    %v51 = vmax.f32 %v43, 0.0
    %v52 = vmin.f32 %v44, 1.0
    %v53 = vmin.f32 %v45, 1.0
    %v54 = vmin.f32 %v46, 1.0
    %v55 = vmin.f32 %v47, 1.0
    %v56 = vmin.f32 %v48, 1.0
    %v57 = vmin.f32 %v49, 1.0
    %v58 = vmin.f32 %v50, 1.0
    %v59 = vmin.f32 %v51, 1.0
    %v68 = vcombine.low %v52, %v54
    %v69 = vcombine.high %v52, %v54
    %v70 = vcombine.low %v56, %v58
    %v71 = vcombine.high %v56, %v58
    %v73 = vunpack.c.l.s4 1983009808
    %v74 = vunpack.c.0.s8 %v73
    %v75 = vlaneseq
    %v76 = vshrl.u32 %v75, 7
    %v77 = vsub.s32 %v74, %v76
    %v78 = vrot.slane %v68, %v77
    %v80 = vunpack.c.l.s4 1983009808
    %v81 = vunpack.c.0.s8 %v80
    %v82 = vlaneseq
    %v83 = vshrl.u32 %v82, 7
    %v84 = vsub.s32 %v81, %v83
    %v85 = vrot.slane %v69, %v84
    %v87 = vunpack.c.l.s4 1983009808
    %v88 = vunpack.c.0.s8 %v87
    %v89 = vlaneseq
    %v90 = vshrl.u32 %v89, 7
    %v91 = vsub.s32 %v88, %v90
    %v92 = vrot.slane %v70, %v91
    %v94 = vunpack.c.l.s4 1983009808
    %v95 = vunpack.c.0.s8 %v94
    %v96 = vlaneseq
    %v97 = vshrl.u32 %v96, 7
    %v98 = vsub.s32 %v95, %v97
    %v99 = vrot.slane %v71, %v98
    %v100 = vcombine.low %v78, %v92
    %v101 = vcombine.high %v78, %v92
    %v102 = vcombine.low %v85, %v99
    %v103 = vcombine.high %v85, %v99
    %v104 = vcombine.low %v53, %v55
    %v105 = vcombine.low %v57, %v59
    %v107 = vunpack.c.l.s4 1983009808
    %v108 = vunpack.c.0.s8 %v107
    %v109 = vlaneseq
    %v110 = vshrl.u32 %v109, 7
    %v111 = vsub.s32 %v108, %v110
    %v112 = vrot.slane %v104, %v111
    %v114 = vunpack.c.l.s4 1983009808
    %v115 = vunpack.c.0.s8 %v114
    %v116 = vlaneseq
    %v117 = vshrl.u32 %v116, 7
    %v118 = vsub.s32 %v115, %v117
    %v119 = vrot.slane %v105, %v118
    %v120 = vcombine.low %v112, %v119
    %v121 = vcombine.high %v112, %v119
    %v128 = vpack.c.bf16 %v100, %v100
    %v129 = vpack.c.bf16 %v101, %v101
    %v130 = vpack.c.bf16 %v102, %v102
    %v131 = vpack.c.bf16 %v103, %v103
    %v132 = vpack.c.bf16 %v120, %v120
    %v133 = vpack.c.bf16 %v121, %v121
    %v134 = vld [vmem:[#allocation2] sm:$0xf]
    %v135 = vld [vmem:[#allocation2 + $0x4] sm:$0xf]
    %v136 = vld [vmem:[#allocation2 + $0x8] sm:$0xf]
    %v137 = vld [vmem:[#allocation2 + $0xc] sm:$0xf]
    %v138 = vld [vmem:[#allocation2 + $0x10] sm:$0xf]
    %v139 = vld [vmem:[#allocation2 + $0x14] sm:$0xf]
    %v140 = vld [vmem:[#allocation2 + $0x18] sm:$0xf]
    %v141 = vld [vmem:[#allocation2 + $0x1c] sm:$0xf]
    %v142 = vld [vmem:[#allocation2 + $0x20] sm:$0xf]
    %v143 = vld [vmem:[#allocation2 + $0x24] sm:$0xf]
    %v144 = vld [vmem:[#allocation2 + $0x28] sm:$0xf]
    %v145 = vld [vmem:[#allocation2 + $0x2c] sm:$0xf]
    %v146 = vld [vmem:[#allocation2 + $0x30] sm:$0xf]
    %v147 = vld [vmem:[#allocation2 + $0x34] sm:$0xf]
    %v148 = vld [vmem:[#allocation2 + $0x38] sm:$0xf]
    %v149 = vld [vmem:[#allocation2 + $0x3c] sm:$0xf]
    %v150 = vld [vmem:[#allocation2 + $0x40] sm:$0xf]
    %v151 = vld [vmem:[#allocation2 + $0x44] sm:$0xf]
    %v152 = vld [vmem:[#allocation2 + $0x48] sm:$0xf]
    %v153 = vld [vmem:[#allocation2 + $0x4c] sm:$0xf]
    %v154 = vld [vmem:[#allocation2 + $0x50] sm:$0xf]
    %v155 = vld [vmem:[#allocation2 + $0x54] sm:$0xf]
    %v156 = vld [vmem:[#allocation2 + $0x58] sm:$0xf]
    %v157 = vld [vmem:[#allocation2 + $0x5c] sm:$0xf]
    %v158 = vld [vmem:[#allocation2 + $0x60] sm:$0xf]
    %v159 = vld [vmem:[#allocation2 + $0x64] sm:$0xf]
    %v160 = vld [vmem:[#allocation2 + $0x68] sm:$0xf]
    %v161 = vld [vmem:[#allocation2 + $0x6c] sm:$0xf]
    %v162 = vld [vmem:[#allocation2 + $0x70] sm:$0xf]
    %v163 = vld [vmem:[#allocation2 + $0x74] sm:$0xf]
    %v164 = vld [vmem:[#allocation2 + $0x78] sm:$0xf]
    %v165 = vld [vmem:[#allocation2 + $0x7c] sm:$0xf]
    %v166 = vld [vmem:[#allocation2 + $0x80] sm:$0xf]
    %v167 = vld [vmem:[#allocation2 + $0x84] sm:$0xf]
    %v168 = vld [vmem:[#allocation2 + $0x88] sm:$0xf]
    %v169 = vld [vmem:[#allocation2 + $0x8c] sm:$0xf]
    %v170 = vld [vmem:[#allocation2 + $0x90] sm:$0xf]
    %v171 = vld [vmem:[#allocation2 + $0x94] sm:$0xf]
    %v172 = vld [vmem:[#allocation2 + $0x98] sm:$0xf]
    %v173 = vld [vmem:[#allocation2 + $0x9c] sm:$0xf]
    %v174 = vld [vmem:[#allocation2 + $0xa0] sm:$0xf]
    %v175 = vld [vmem:[#allocation2 + $0xa4] sm:$0xf]
    %v176 = vld [vmem:[#allocation2 + $0xa8] sm:$0xf]
    %v177 = vld [vmem:[#allocation2 + $0xac] sm:$0xf]
    %v178 = vld [vmem:[#allocation2 + $0xb0] sm:$0xf]
    %v179 = vld [vmem:[#allocation2 + $0xb4] sm:$0xf]
    %v180 = vld [vmem:[#allocation2 + $0xb8] sm:$0xf]
    %v181 = vld [vmem:[#allocation2 + $0xbc] sm:$0xf]
    %v182 = vld [vmem:[#allocation2 + $0xc0] sm:$0xf]
    %v183 = vld [vmem:[#allocation2 + $0xc4] sm:$0xf]
    %v184 = vld [vmem:[#allocation2 + $0xc8] sm:$0xf]
    %v185 = vld [vmem:[#allocation2 + $0xcc] sm:$0xf]
    %v186 = vld [vmem:[#allocation2 + $0xd0] sm:$0xf]
    %v187 = vld [vmem:[#allocation2 + $0xd4] sm:$0xf]
    %v188 = vld [vmem:[#allocation2 + $0xd8] sm:$0xf]
    %v189 = vld [vmem:[#allocation2 + $0xdc] sm:$0xf]
    %v190 = vld [vmem:[#allocation2 + $0xe0] sm:$0xf]
    %v191 = vld [vmem:[#allocation2 + $0xe4] sm:$0xf]
    %v192 = vld [vmem:[#allocation2 + $0xe8] sm:$0xf]
    %v193 = vld [vmem:[#allocation2 + $0xec] sm:$0xf]
    %v194 = vld [vmem:[#allocation2 + $0xf0] sm:$0xf]
    %v195 = vld [vmem:[#allocation2 + $0xf4] sm:$0xf]
    %v196 = vld [vmem:[#allocation2 + $0xf8] sm:$0xf]
    %v197 = vld [vmem:[#allocation2 + $0xfc] sm:$0xf]
    %v198 = vld [vmem:[#allocation2 + $0x100] sm:$0xf]
    %v199 = vld [vmem:[#allocation2 + $0x104] sm:$0xf]
    %v200 = vld [vmem:[#allocation2 + $0x108] sm:$0xf]
    %v201 = vld [vmem:[#allocation2 + $0x10c] sm:$0xf]
    %v202 = vld [vmem:[#allocation2 + $0x110] sm:$0xf]
    %v203 = vld [vmem:[#allocation2 + $0x114] sm:$0xf]
    %v204 = vld [vmem:[#allocation2 + $0x118] sm:$0xf]
    %v205 = vld [vmem:[#allocation2 + $0x11c] sm:$0xf]
    %v206 = vld [vmem:[#allocation2 + $0x120] sm:$0xf]
    %v207 = vld [vmem:[#allocation2 + $0x124] sm:$0xf]
    %v208 = vld [vmem:[#allocation2 + $0x128] sm:$0xf]
    %v209 = vld [vmem:[#allocation2 + $0x12c] sm:$0xf]
    %v210 = vld [vmem:[#allocation2 + $0x130] sm:$0xf]
    %v211 = vld [vmem:[#allocation2 + $0x134] sm:$0xf]
    %v212 = vld [vmem:[#allocation2 + $0x138] sm:$0xf]
    %v213 = vld [vmem:[#allocation2 + $0x13c] sm:$0xf]
    %v214 = vld [vmem:[#allocation2 + $0x140] sm:$0xf]
    %v215 = vld [vmem:[#allocation2 + $0x144] sm:$0xf]
    %v216 = vld [vmem:[#allocation2 + $0x148] sm:$0xf]
    %v217 = vld [vmem:[#allocation2 + $0x14c] sm:$0xf]
    %v218 = vld [vmem:[#allocation2 + $0x150] sm:$0xf]
    %v219 = vld [vmem:[#allocation2 + $0x154] sm:$0xf]
    %v220 = vld [vmem:[#allocation2 + $0x158] sm:$0xf]
    %v221 = vld [vmem:[#allocation2 + $0x15c] sm:$0xf]
    %v222 = vld [vmem:[#allocation2 + $0x160] sm:$0xf]
    %v223 = vld [vmem:[#allocation2 + $0x164] sm:$0xf]
    %v224 = vld [vmem:[#allocation2 + $0x168] sm:$0xf]
    %v225 = vld [vmem:[#allocation2 + $0x16c] sm:$0xf]
    %v226 = vld [vmem:[#allocation2 + $0x170] sm:$0xf]
    %v227 = vld [vmem:[#allocation2 + $0x174] sm:$0xf]
    %v228 = vld [vmem:[#allocation2 + $0x178] sm:$0xf]
    %v229 = vld [vmem:[#allocation2 + $0x17c] sm:$0xf]
    %v230 = vld [vmem:[%s2] sm:$0x1]
    %v232 = vlaneseq
    %v233 = vshrl.u32 %v232, 7
    %v234 = vsub.s32 0, %v233
    %v235 = vrot.slane %v230, %v234
    %v333 = vunpack.c.l.b16 %v134
    %v334 = vunpack.c.l.b16 %v135
    %v335 = vunpack.c.l.b16 %v136
    %v336 = vunpack.c.l.b16 %v137
    %v337 = vunpack.c.l.b16 %v138
    %v338 = vunpack.c.l.b16 %v139
    %v339 = vunpack.c.l.b16 %v140
    %v340 = vunpack.c.l.b16 %v141
    %v341 = vunpack.c.l.b16 %v142
    %v342 = vunpack.c.l.b16 %v143
    %v343 = vunpack.c.l.b16 %v144
    %v344 = vunpack.c.l.b16 %v145
    %v345 = vunpack.c.l.b16 %v146
    %v346 = vunpack.c.l.b16 %v147
    %v347 = vunpack.c.l.b16 %v148
    %v348 = vunpack.c.l.b16 %v149
    %v349 = vunpack.c.l.b16 %v150
    %v350 = vunpack.c.l.b16 %v151
    %v351 = vunpack.c.l.b16 %v152
    %v352 = vunpack.c.l.b16 %v153
    %v353 = vunpack.c.l.b16 %v154
    %v354 = vunpack.c.l.b16 %v155
    %v355 = vunpack.c.l.b16 %v156
    %v356 = vunpack.c.l.b16 %v157
    %v357 = vunpack.c.l.b16 %v158
    %v358 = vunpack.c.l.b16 %v159
    %v359 = vunpack.c.l.b16 %v160
    %v360 = vunpack.c.l.b16 %v161
    %v361 = vunpack.c.l.b16 %v162
    %v362 = vunpack.c.l.b16 %v163
    %v363 = vunpack.c.l.b16 %v164
    %v364 = vunpack.c.l.b16 %v165
    %v365 = vunpack.c.l.b16 %v166
    %v366 = vunpack.c.l.b16 %v167
    %v367 = vunpack.c.l.b16 %v168
    %v368 = vunpack.c.l.b16 %v169
    %v369 = vunpack.c.l.b16 %v170
    %v370 = vunpack.c.l.b16 %v171
    %v371 = vunpack.c.l.b16 %v172
    %v372 = vunpack.c.l.b16 %v173
    %v373 = vunpack.c.l.b16 %v174
    %v374 = vunpack.c.l.b16 %v175
    %v375 = vunpack.c.l.b16 %v176
    %v376 = vunpack.c.l.b16 %v177
    %v377 = vunpack.c.l.b16 %v178
    %v378 = vunpack.c.l.b16 %v179
    %v379 = vunpack.c.l.b16 %v180
    %v380 = vunpack.c.l.b16 %v181
    %v381 = vunpack.c.l.b16 %v182
    %v382 = vunpack.c.l.b16 %v183
    %v383 = vunpack.c.l.b16 %v184
    %v384 = vunpack.c.l.b16 %v185
    %v385 = vunpack.c.l.b16 %v186
    %v386 = vunpack.c.l.b16 %v187
    %v387 = vunpack.c.l.b16 %v188
    %v388 = vunpack.c.l.b16 %v189
    %v389 = vunpack.c.l.b16 %v190
    %v390 = vunpack.c.l.b16 %v191
    %v391 = vunpack.c.l.b16 %v192
    %v392 = vunpack.c.l.b16 %v193
    %v393 = vunpack.c.l.b16 %v194
    %v394 = vunpack.c.l.b16 %v195
    %v395 = vunpack.c.l.b16 %v196
    %v396 = vunpack.c.l.b16 %v197
    %v397 = vunpack.c.l.b16 %v198
    %v398 = vunpack.c.l.b16 %v199
    %v399 = vunpack.c.l.b16 %v200
    %v400 = vunpack.c.l.b16 %v201
    %v401 = vunpack.c.l.b16 %v202
    %v402 = vunpack.c.l.b16 %v203
    %v403 = vunpack.c.l.b16 %v204
    %v404 = vunpack.c.l.b16 %v205
    %v405 = vunpack.c.l.b16 %v206
    %v406 = vunpack.c.l.b16 %v207
    %v407 = vunpack.c.l.b16 %v208
    %v408 = vunpack.c.l.b16 %v209
    %v409 = vunpack.c.l.b16 %v210
    %v410 = vunpack.c.l.b16 %v211
    %v411 = vunpack.c.l.b16 %v212
    %v412 = vunpack.c.l.b16 %v213
    %v413 = vunpack.c.l.b16 %v214
    %v414 = vunpack.c.l.b16 %v215
    %v415 = vunpack.c.l.b16 %v216
    %v416 = vunpack.c.l.b16 %v217
    %v417 = vunpack.c.l.b16 %v218
    %v418 = vunpack.c.l.b16 %v219
    %v419 = vunpack.c.l.b16 %v220
    %v420 = vunpack.c.l.b16 %v221
    %v421 = vunpack.c.l.b16 %v222
    %v422 = vunpack.c.l.b16 %v223
    %v423 = vunpack.c.l.b16 %v224
    %v424 = vunpack.c.l.b16 %v225
    %v425 = vunpack.c.l.b16 %v226
    %v426 = vunpack.c.l.b16 %v227
    %v427 = vunpack.c.l.b16 %v228
    %v428 = vunpack.c.l.b16 %v229
    %v429 = vpack.c.b16 %v334, %v333
    %v430 = vpack.c.b16 %v336, %v335
    %v431 = vpack.c.b16 %v338, %v337
    %v432 = vpack.c.b16 %v340, %v339
    %v433 = vpack.c.b16 %v342, %v341
    %v434 = vpack.c.b16 %v344, %v343
    %v435 = vpack.c.b16 %v346, %v345
    %v436 = vpack.c.b16 %v348, %v347
    %v437 = vpack.c.b16 %v350, %v349
    %v438 = vpack.c.b16 %v352, %v351
    %v439 = vpack.c.b16 %v354, %v353
    %v440 = vpack.c.b16 %v356, %v355
    %v441 = vpack.c.b16 %v358, %v357
    %v442 = vpack.c.b16 %v360, %v359
    %v443 = vpack.c.b16 %v362, %v361
    %v444 = vpack.c.b16 %v364, %v363
    %v445 = vpack.c.b16 %v366, %v365
    %v446 = vpack.c.b16 %v368, %v367
    %v447 = vpack.c.b16 %v370, %v369
    %v448 = vpack.c.b16 %v372, %v371
    %v449 = vpack.c.b16 %v374, %v373
    %v450 = vpack.c.b16 %v376, %v375
    %v451 = vpack.c.b16 %v378, %v377
    %v452 = vpack.c.b16 %v380, %v379
    %v453 = vpack.c.b16 %v382, %v381
    %v454 = vpack.c.b16 %v384, %v383
    %v455 = vpack.c.b16 %v386, %v385
    %v456 = vpack.c.b16 %v388, %v387
    %v457 = vpack.c.b16 %v390, %v389
    %v458 = vpack.c.b16 %v392, %v391
    %v459 = vpack.c.b16 %v394, %v393
    %v460 = vpack.c.b16 %v396, %v395
    %v461 = vpack.c.b16 %v398, %v397
    %v462 = vpack.c.b16 %v400, %v399
    %v463 = vpack.c.b16 %v402, %v401
    %v464 = vpack.c.b16 %v404, %v403
    %v465 = vpack.c.b16 %v406, %v405
    %v466 = vpack.c.b16 %v408, %v407
    %v467 = vpack.c.b16 %v410, %v409
    %v468 = vpack.c.b16 %v412, %v411
    %v469 = vpack.c.b16 %v414, %v413
    %v470 = vpack.c.b16 %v416, %v415
    %v471 = vpack.c.b16 %v418, %v417
    %v472 = vpack.c.b16 %v420, %v419
    %v473 = vpack.c.b16 %v422, %v421
    %v474 = vpack.c.b16 %v424, %v423
    %v475 = vpack.c.b16 %v426, %v425
    %v476 = vpack.c.b16 %v428, %v427
    %525 = vmatprep.subr.bf16.mxu0 0
    %526 = vmatpush1.bf16.msra.mxu0 %v436
    %527 = vmatprep.subr.bf16.mxu0 0
    %528 = vmatpush1.bf16.msra.mxu0 %v435
    %529 = vmatprep.subr.bf16.mxu0 0
    %530 = vmatpush1.bf16.msra.mxu0 %v434
    %531 = vmatprep.subr.bf16.mxu0 0
    %532 = vmatpush1.bf16.msra.mxu0 %v433
    %533 = vmatprep.subr.bf16.mxu0 0
    %534 = vmatpush1.bf16.msra.mxu0 %v432
    %535 = vmatprep.subr.bf16.mxu0 0
    %536 = vmatpush1.bf16.msra.mxu0 %v431
    %537 = vmatprep.subr.bf16.mxu0 0
    %538 = vmatpush1.bf16.msra.mxu0 %v430
    %539 = vmatprep.subr.bf16.mxu0 0
    %540 = vmatpush1.bf16.msra.mxu0 %v429
    %541 = vmatprep.subr.bf16.mxu0 0
    %542 = vmatpush2.bf16.msra.mxu0 %v444
    %543 = vmatprep.subr.bf16.mxu0 0
    %544 = vmatpush2.bf16.msra.mxu0 %v443
    %545 = vmatprep.subr.bf16.mxu0 0
    %546 = vmatpush2.bf16.msra.mxu0 %v442
    %547 = vmatprep.subr.bf16.mxu0 0
    %548 = vmatpush2.bf16.msra.mxu0 %v441
    %549 = vmatprep.subr.bf16.mxu0 0
    %550 = vmatpush2.bf16.msra.mxu0 %v440
    %551 = vmatprep.subr.bf16.mxu0 0
    %552 = vmatpush2.bf16.msra.mxu0 %v439
    %553 = vmatprep.subr.bf16.mxu0 0
    %554 = vmatpush2.bf16.msra.mxu0 %v438
    %555 = vmatprep.subr.bf16.mxu0 0
    %556 = vmatpush2.bf16.msra.mxu0 %v437
    %557 = vmatprep.mubr.bf16.mxu0 %v129
    %558 = vmatmul.mubr.bf16.gmra.mxu0 %v128
    %v559 = vpop.f32.mrf.mxu0
    %v560 = vadd.f32 %v235, %v559
    %v561 = vpop.f32.mrf.mxu0
    %v562 = vpop.f32.mrf.mxu0
    %v563 = vpop.f32.mrf.mxu0
    %564 = vdwg.mxu0
    %565 = vmatprep.subr.bf16.mxu0 0
    %566 = vmatpush1.bf16.msra.mxu0 %v452
    %567 = vmatprep.subr.bf16.mxu0 0
    %568 = vmatpush1.bf16.msra.mxu0 %v451
    %569 = vmatprep.subr.bf16.mxu0 0
    %570 = vmatpush1.bf16.msra.mxu0 %v450
    %571 = vmatprep.subr.bf16.mxu0 0
    %572 = vmatpush1.bf16.msra.mxu0 %v449
    %573 = vmatprep.subr.bf16.mxu0 0
    %574 = vmatpush1.bf16.msra.mxu0 %v448
    %575 = vmatprep.subr.bf16.mxu0 0
    %576 = vmatpush1.bf16.msra.mxu0 %v447
    %577 = vmatprep.subr.bf16.mxu0 0
    %578 = vmatpush1.bf16.msra.mxu0 %v446
    %579 = vmatprep.subr.bf16.mxu0 0
    %580 = vmatpush1.bf16.msra.mxu0 %v445
    %581 = vmatprep.subr.bf16.mxu0 0
    %582 = vmatpush2.bf16.msra.mxu0 %v460
    %583 = vmatprep.subr.bf16.mxu0 0
    %584 = vmatpush2.bf16.msra.mxu0 %v459
    %585 = vmatprep.subr.bf16.mxu0 0
    %586 = vmatpush2.bf16.msra.mxu0 %v458
    %587 = vmatprep.subr.bf16.mxu0 0
    %588 = vmatpush2.bf16.msra.mxu0 %v457
    %589 = vmatprep.subr.bf16.mxu0 0
    %590 = vmatpush2.bf16.msra.mxu0 %v456
    %591 = vmatprep.subr.bf16.mxu0 0
    %592 = vmatpush2.bf16.msra.mxu0 %v455
    %593 = vmatprep.subr.bf16.mxu0 0
    %594 = vmatpush2.bf16.msra.mxu0 %v454
    %595 = vmatprep.subr.bf16.mxu0 0
    %596 = vmatpush2.bf16.msra.mxu0 %v453
    %597 = vmatprep.mubr.bf16.mxu0 %v131
    %598 = vmatmul.mubr.bf16.gmra.mxu0 %v130
    %v599 = vpop.f32.mrf.mxu0
    %v600 = vadd.f32 %v560, %v599
    %v601 = vpop.f32.mrf.mxu0
    %v602 = vpop.f32.mrf.mxu0
    %v603 = vpop.f32.mrf.mxu0
    %604 = vdwg.mxu0
    %605 = vmatprep.subr.bf16.mxu0 0
    %606 = vmatpush1.bf16.msra.mxu0 %v468
    %607 = vmatprep.subr.bf16.mxu0 0
    %608 = vmatpush1.bf16.msra.mxu0 %v467
    %609 = vmatprep.subr.bf16.mxu0 0
    %610 = vmatpush1.bf16.msra.mxu0 %v466
    %611 = vmatprep.subr.bf16.mxu0 0
    %612 = vmatpush1.bf16.msra.mxu0 %v465
    %613 = vmatprep.subr.bf16.mxu0 0
    %614 = vmatpush1.bf16.msra.mxu0 %v464
    %615 = vmatprep.subr.bf16.mxu0 0
    %616 = vmatpush1.bf16.msra.mxu0 %v463
    %617 = vmatprep.subr.bf16.mxu0 0
    %618 = vmatpush1.bf16.msra.mxu0 %v462
    %619 = vmatprep.subr.bf16.mxu0 0
    %620 = vmatpush1.bf16.msra.mxu0 %v461
    %621 = vmatprep.subr.bf16.mxu0 0
    %622 = vmatpush2.bf16.msra.mxu0 %v476
    %623 = vmatprep.subr.bf16.mxu0 0
    %624 = vmatpush2.bf16.msra.mxu0 %v475
    %625 = vmatprep.subr.bf16.mxu0 0
    %626 = vmatpush2.bf16.msra.mxu0 %v474
    %627 = vmatprep.subr.bf16.mxu0 0
    %628 = vmatpush2.bf16.msra.mxu0 %v473
    %629 = vmatprep.subr.bf16.mxu0 0
    %630 = vmatpush2.bf16.msra.mxu0 %v472
    %631 = vmatprep.subr.bf16.mxu0 0
    %632 = vmatpush2.bf16.msra.mxu0 %v471
    %633 = vmatprep.subr.bf16.mxu0 0
    %634 = vmatpush2.bf16.msra.mxu0 %v470
    %635 = vmatprep.subr.bf16.mxu0 0
    %636 = vmatpush2.bf16.msra.mxu0 %v469
    %637 = vmatprep.mubr.bf16.mxu0 %v133
    %638 = vmatmul.mubr.bf16.gmra.mxu0 %v132
    %v639 = vpop.f32.mrf.mxu0
    %v640 = vadd.f32 %v600, %v639
    %v641 = vpop.f32.mrf.mxu0
    %v642 = vpop.f32.mrf.mxu0
    %v643 = vpop.f32.mrf.mxu0
    %644 = vdwg.mxu0
    %v645 = vmax.f32 %v640, 0.0
    %v646 = vpack.c.bf16 %v645, %v645
    %v647 = vld [vmem:[%s3] sm:$0xf]
    %v648 = vld [vmem:[%s3 + $0x4] sm:$0xf]
    %v649 = vld [vmem:[%s3 + $0x8] sm:$0xf]
    %v650 = vld [vmem:[%s3 + $0xc] sm:$0xf]
    %v651 = vld [vmem:[%s3 + $0x10] sm:$0xf]
    %v652 = vld [vmem:[%s3 + $0x14] sm:$0xf]
    %v653 = vld [vmem:[%s3 + $0x18] sm:$0xf]
    %v654 = vld [vmem:[%s3 + $0x1c] sm:$0xf]
    %v655 = vld [vmem:[%s3 + $0x20] sm:$0xf]
    %v656 = vld [vmem:[%s3 + $0x24] sm:$0xf]
    %v657 = vld [vmem:[%s3 + $0x28] sm:$0xf]
    %v658 = vld [vmem:[%s3 + $0x2c] sm:$0xf]
    %v659 = vld [vmem:[%s3 + $0x30] sm:$0xf]
    %v660 = vld [vmem:[%s3 + $0x34] sm:$0xf]
    %v661 = vld [vmem:[%s3 + $0x38] sm:$0xf]
    %v662 = vld [vmem:[%s3 + $0x3c] sm:$0xf]
    %v663 = vld [vmem:[%s4] sm:$0x1]
    %v665 = vlaneseq
    %v666 = vshrl.u32 %v665, 7
    %v667 = vsub.s32 0, %v666
    %v668 = vrot.slane %v663, %v667
    %v686 = vunpack.c.l.b16 %v647
    %v687 = vunpack.c.l.b16 %v648
    %v688 = vunpack.c.l.b16 %v649
    %v689 = vunpack.c.l.b16 %v650
    %v690 = vunpack.c.l.b16 %v651
    %v691 = vunpack.c.l.b16 %v652
    %v692 = vunpack.c.l.b16 %v653
    %v693 = vunpack.c.l.b16 %v654
    %v694 = vunpack.c.l.b16 %v655
    %v695 = vunpack.c.l.b16 %v656
    %v696 = vunpack.c.l.b16 %v657
    %v697 = vunpack.c.l.b16 %v658
    %v698 = vunpack.c.l.b16 %v659
    %v699 = vunpack.c.l.b16 %v660
    %v700 = vunpack.c.l.b16 %v661
    %v701 = vunpack.c.l.b16 %v662
    %v702 = vpack.c.b16 %v687, %v686
    %v703 = vpack.c.b16 %v689, %v688
    %v704 = vpack.c.b16 %v691, %v690
    %v705 = vpack.c.b16 %v693, %v692
    %v706 = vpack.c.b16 %v695, %v694
    %v707 = vpack.c.b16 %v697, %v696
    %v708 = vpack.c.b16 %v699, %v698
    %v709 = vpack.c.b16 %v701, %v700
    %718 = vmatprep.subr.bf16.mxu0 0
    %719 = vmatpush1.bf16.msra.mxu0 %v709
    %720 = vmatprep.subr.bf16.mxu0 0
    %721 = vmatpush1.bf16.msra.mxu0 %v708
    %722 = vmatprep.subr.bf16.mxu0 0
    %723 = vmatpush1.bf16.msra.mxu0 %v707
    %724 = vmatprep.subr.bf16.mxu0 0
    %725 = vmatpush1.bf16.msra.mxu0 %v706
    %726 = vmatprep.subr.bf16.mxu0 0
    %727 = vmatpush1.bf16.msra.mxu0 %v705
    %728 = vmatprep.subr.bf16.mxu0 0
    %729 = vmatpush1.bf16.msra.mxu0 %v704
    %730 = vmatprep.subr.bf16.mxu0 0
    %731 = vmatpush1.bf16.msra.mxu0 %v703
    %732 = vmatprep.subr.bf16.mxu0 0
    %733 = vmatpush1.bf16.msra.mxu0 %v702
    %734 = vmatprep.subr.bf16.mxu0 0
    %735 = vmatpush2.bf16.msra.mxu0 0
    %736 = vmatprep.subr.bf16.mxu0 0
    %737 = vmatpush2.bf16.msra.mxu0 0
    %738 = vmatprep.subr.bf16.mxu0 0
    %739 = vmatpush2.bf16.msra.mxu0 0
    %740 = vmatprep.subr.bf16.mxu0 0
    %741 = vmatpush2.bf16.msra.mxu0 0
    %742 = vmatprep.subr.bf16.mxu0 0
    %743 = vmatpush2.bf16.msra.mxu0 0
    %744 = vmatprep.subr.bf16.mxu0 0
    %745 = vmatpush2.bf16.msra.mxu0 0
    %746 = vmatprep.subr.bf16.mxu0 0
    %747 = vmatpush2.bf16.msra.mxu0 0
    %748 = vmatprep.subr.bf16.mxu0 0
    %749 = vmatpush2.bf16.msra.mxu0 0
    %750 = vmatprep.mubr.bf16.mxu0 0
    %751 = vmatmul.mubr.bf16.gmra.mxu0 %v646
    %v752 = vpop.f32.mrf.mxu0
    %v753 = vadd.f32 %v668, %v752
    %v754 = vpop.f32.mrf.mxu0
    %v755 = vpop.f32.mrf.mxu0
    %v756 = vpop.f32.mrf.mxu0
    %757 = vdwg.mxu0
    %758 = vst [vmem:[#allocation5] sm:$0xff] %v753
    // Predicated region
    $region26: #{_forward_impl.1} parent=1 // pred_check
      _
    $region27: #{_forward_impl.1} parent=1 // pred_check_branch
      %760 = sbr.rel (0) target = $region29
    $region28: #{_forward_impl.1} parent=1 // pred_region
      %s762 = ssub.s32 128, 32
      %763 = vsyncadd [#allocation4], %s762
      %s764 = sshll.u32 [#allocation5], 4
      %s765 = int_to_ptr.vmem [resolvable:$true] %s764
      %770 = dma.vmem_to_hbm [thread:$0]  %s765, 32, %s5, [#allocation4], 32, 32, 2
    $region29: #{_forward_impl.1} parent=1 // pred_fallthru
      _
    // Predicated region
    $region30: #{_forward_impl.1} parent=1 // pred_check
      _
    $region31: #{_forward_impl.1} parent=1 // pred_check_branch
      %772 = sbr.rel (0) target = $region33
    $region32: #{_forward_impl.1} parent=1 // pred_region
      %773 = dma.done [#allocation4], 128
    $region33: #{_forward_impl.1} parent=1 // pred_fallthru
      _
    %774 = vsyncpa [#allocation3], 1
    %775 = vsyncpa [#allocation4], 1

// kernel: _forward_impl.1
$region0: #{_forward_impl.1}
  #allocation0 [shape = 'u32[]', space=smem, size = 0x4, offset = 0x4, fixed_abs, tag = 'smem constant byte address 0x4 - core index']
  #allocation1 [shape = 'u32[144,128]{1,0:T(1,128)}', space=vmem, size = 0x12000, scoped, tag = 'internal scratch']
  %s0 = inlined_call_operand.vmem [shape: f32[2,768], index: 0, kind: input, shape index: {}]
  %s1 = inlined_call_operand.hbm [shape: bf16[768,128], index: 1, kind: input, shape index: {}]
  %s2 = inlined_call_operand.vmem [shape: f32[1,128], index: 2, kind: input, shape index: {}]
  %s3 = inlined_call_operand.vmem [shape: bf16[128,128], index: 3, kind: input, shape index: {}]
  %s4 = inlined_call_operand.vmem [shape: f32[1,128], index: 4, kind: input, shape index: {}]
  %s5 = inlined_call_operand.hbm [shape: f32[2,128], index: 5, kind: output, shape index: {}]
  %s6 = sld [smem:[#allocation0]]
  $region34: #{_forward_impl.1} parent=0
    _
  %s8 = ssub.s32 1, %s6
  %s9 = scalar_select 0, %s8, %s6
  $region1: #{_forward_impl.1} parent=0
    #allocation2 [shape = 'u8[196608]{0}', space=vmem, size = 0x30000, scoped, tag = 'input window, operand 1, single buffered']
    #allocation3 [shape = 's32[1]{0}', space=sflag, size = 0x4, scoped, tag = 'scoped memory for _forward_impl.1']
    #allocation4 [shape = 's32[1]{0}', space=sflag, size = 0x4, scoped, tag = 'scoped memory for _forward_impl.1']
    #allocation5 [shape = 'u8[4096]{0}', space=vmem, size = 0x1000, scoped, tag = 'output window, operand 0, single buffered']
    %10 = vsyncpa [#allocation3], 0
    %11 = vsyncpa [#allocation4], 0
    // Predicated region
    $region2: #{_forward_impl.1} parent=1 // pred_check
      _
    $region3: #{_forward_impl.1} parent=1 // pred_check_branch
      %13 = sbr.rel (0) target = $region5
    $region4: #{_forward_impl.1} parent=1 // pred_region
      _
    $region5: #{_forward_impl.1} parent=1 // pred_fallthru
      _
    // Predicated region
    $region6: #{_forward_impl.1} parent=1 // pred_check
      _
    $region7: #{_forward_impl.1} parent=1 // pred_check_branch
      %15 = sbr.rel (0) target = $region9
    $region8: #{_forward_impl.1} parent=1 // pred_region
      %s17 = ssub.s32 6144, 6144
      %18 = vsyncadd [#allocation3], %s17
      %s19 = sshll.u32 [#allocation2], 4
      %s20 = int_to_ptr.vmem [resolvable:$true] %s19
      %25 = dma.hbm_to_vmem [thread:$0]  %s1, 6144, %s20, [#allocation3], 64, 64, 4
    $region9: #{_forward_impl.1} parent=1 // pred_fallthru
      _
    // Predicated region
    $region10: #{_forward_impl.1} parent=1 // pred_check
      _
    $region11: #{_forward_impl.1} parent=1 // pred_check_branch
      %27 = sbr.rel (0) target = $region13
    $region12: #{_forward_impl.1} parent=1 // pred_region
      _
    $region13: #{_forward_impl.1} parent=1 // pred_fallthru
      _
    // Predicated region
    $region14: #{_forward_impl.1} parent=1 // pred_check
      _
    $region15: #{_forward_impl.1} parent=1 // pred_check_branch
      %29 = sbr.rel (0) target = $region17
    $region16: #{_forward_impl.1} parent=1 // pred_region
      _
    $region17: #{_forward_impl.1} parent=1 // pred_fallthru
      _
    // Predicated region
    $region18: #{_forward_impl.1} parent=1 // pred_check
      _
    $region19: #{_forward_impl.1} parent=1 // pred_check_branch
      %31 = sbr.rel (0) target = $region21
    $region20: #{_forward_impl.1} parent=1 // pred_region
      _
    $region21: #{_forward_impl.1} parent=1 // pred_fallthru
      _
    // Predicated region
    $region22: #{_forward_impl.1} parent=1 // pred_check
      _
    $region23: #{_forward_impl.1} parent=1 // pred_check_branch
      %33 = sbr.rel (0) target = $region25
    $region24: #{_forward_impl.1} parent=1 // pred_region
      %34 = dma.done [#allocation3], 6144
    $region25: #{_forward_impl.1} parent=1 // pred_fallthru
      _
    %v36 = vld [vmem:[%s0] sm:$0xff]
    %v37 = vld [vmem:[%s0 + $0x8] sm:$0xf]
    %v38 = vld [vmem:[%s0 + $0xc] sm:$0xff]
    %v39 = vld [vmem:[%s0 + $0x14] sm:$0xf]
    %v40 = vld [vmem:[%s0 + $0x18] sm:$0xff]
    %v41 = vld [vmem:[%s0 + $0x20] sm:$0xf]
    %v42 = vld [vmem:[%s0 + $0x24] sm:$0xff]
    %v43 = vld [vmem:[%s0 + $0x2c] sm:$0xf]
    %v44 = vmax.f32 %v36, 0.0
    %v45 = vmax.f32 %v37, 0.0
    %v46 = vmax.f32 %v38, 0.0
    %v47 = vmax.f32 %v39, 0.0
    %v48 = vmax.f32 %v40, 0.0
    %v49 = vmax.f32 %v41, 0.0
    %v50 = vmax.f32 %v42, 0.0
    %v51 = vmax.f32 %v43, 0.0
    %v52 = vmin.f32 %v44, 1.0
    %v53 = vmin.f32 %v45, 1.0
    %v54 = vmin.f32 %v46, 1.0
    %v55 = vmin.f32 %v47, 1.0
    %v56 = vmin.f32 %v48, 1.0
    %v57 = vmin.f32 %v49, 1.0
    %v58 = vmin.f32 %v50, 1.0
    %v59 = vmin.f32 %v51, 1.0
    %v68 = vcombine.low %v52, %v54
    %v69 = vcombine.high %v52, %v54
    %v70 = vcombine.low %v56, %v58
    %v71 = vcombine.high %v56, %v58
    %v73 = vunpack.c.l.s4 1983009808
    %v74 = vunpack.c.0.s8 %v73
    %v75 = vlaneseq
    %v76 = vshrl.u32 %v75, 7
    %v77 = vsub.s32 %v74, %v76
    %v78 = vrot.slane %v68, %v77
    %v80 = vunpack.c.l.s4 1983009808
    %v81 = vunpack.c.0.s8 %v80
    %v82 = vlaneseq
    %v83 = vshrl.u32 %v82, 7
    %v84 = vsub.s32 %v81, %v83
    %v85 = vrot.slane %v69, %v84
    %v87 = vunpack.c.l.s4 1983009808
    %v88 = vunpack.c.0.s8 %v87
    %v89 = vlaneseq
    %v90 = vshrl.u32 %v89, 7
    %v91 = vsub.s32 %v88, %v90
    %v92 = vrot.slane %v70, %v91
    %v94 = vunpack.c.l.s4 1983009808
    %v95 = vunpack.c.0.s8 %v94
    %v96 = vlaneseq
    %v97 = vshrl.u32 %v96, 7
    %v98 = vsub.s32 %v95, %v97
    %v99 = vrot.slane %v71, %v98
    %v100 = vcombine.low %v78, %v92
    %v101 = vcombine.high %v78, %v92
    %v102 = vcombine.low %v85, %v99
    %v103 = vcombine.high %v85, %v99
    %v104 = vcombine.low %v53, %v55
    %v105 = vcombine.low %v57, %v59
    %v107 = vunpack.c.l.s4 1983009808
    %v108 = vunpack.c.0.s8 %v107
    %v109 = vlaneseq
    %v110 = vshrl.u32 %v109, 7
    %v111 = vsub.s32 %v108, %v110
    %v112 = vrot.slane %v104, %v111
    %v114 = vunpack.c.l.s4 1983009808
    %v115 = vunpack.c.0.s8 %v114
    %v116 = vlaneseq
    %v117 = vshrl.u32 %v116, 7
    %v118 = vsub.s32 %v115, %v117
    %v119 = vrot.slane %v105, %v118
    %v120 = vcombine.low %v112, %v119
    %v121 = vcombine.high %v112, %v119
    %v128 = vpack.c.bf16 %v100, %v100
    %v129 = vpack.c.bf16 %v101, %v101
    %v130 = vpack.c.bf16 %v102, %v102
    %v131 = vpack.c.bf16 %v103, %v103
    %v132 = vpack.c.bf16 %v120, %v120
    %v133 = vpack.c.bf16 %v121, %v121
    %v134 = vld [vmem:[#allocation2] sm:$0xf]
    %v135 = vld [vmem:[#allocation2 + $0x4] sm:$0xf]
    %v136 = vld [vmem:[#allocation2 + $0x8] sm:$0xf]
    %v137 = vld [vmem:[#allocation2 + $0xc] sm:$0xf]
    %v138 = vld [vmem:[#allocation2 + $0x10] sm:$0xf]
    %v139 = vld [vmem:[#allocation2 + $0x14] sm:$0xf]
    %v140 = vld [vmem:[#allocation2 + $0x18] sm:$0xf]
    %v141 = vld [vmem:[#allocation2 + $0x1c] sm:$0xf]
    %v142 = vld [vmem:[#allocation2 + $0x20] sm:$0xf]
    %v143 = vld [vmem:[#allocation2 + $0x24] sm:$0xf]
    %v144 = vld [vmem:[#allocation2 + $0x28] sm:$0xf]
    %v145 = vld [vmem:[#allocation2 + $0x2c] sm:$0xf]
    %v146 = vld [vmem:[#allocation2 + $0x30] sm:$0xf]
    %v147 = vld [vmem:[#allocation2 + $0x34] sm:$0xf]
    %v148 = vld [vmem:[#allocation2 + $0x38] sm:$0xf]
    %v149 = vld [vmem:[#allocation2 + $0x3c] sm:$0xf]
    %v150 = vld [vmem:[#allocation2 + $0x40] sm:$0xf]
    %v151 = vld [vmem:[#allocation2 + $0x44] sm:$0xf]
    %v152 = vld [vmem:[#allocation2 + $0x48] sm:$0xf]
    %v153 = vld [vmem:[#allocation2 + $0x4c] sm:$0xf]
    %v154 = vld [vmem:[#allocation2 + $0x50] sm:$0xf]
    %v155 = vld [vmem:[#allocation2 + $0x54] sm:$0xf]
    %v156 = vld [vmem:[#allocation2 + $0x58] sm:$0xf]
    %v157 = vld [vmem:[#allocation2 + $0x5c] sm:$0xf]
    %v158 = vld [vmem:[#allocation2 + $0x60] sm:$0xf]
    %v159 = vld [vmem:[#allocation2 + $0x64] sm:$0xf]
    %v160 = vld [vmem:[#allocation2 + $0x68] sm:$0xf]
    %v161 = vld [vmem:[#allocation2 + $0x6c] sm:$0xf]
    %v162 = vld [vmem:[#allocation2 + $0x70] sm:$0xf]
    %v163 = vld [vmem:[#allocation2 + $0x74] sm:$0xf]
    %v164 = vld [vmem:[#allocation2 + $0x78] sm:$0xf]
    %v165 = vld [vmem:[#allocation2 + $0x7c] sm:$0xf]
    %v166 = vld [vmem:[#allocation2 + $0x80] sm:$0xf]
    %v167 = vld [vmem:[#allocation2 + $0x84] sm:$0xf]
    %v168 = vld [vmem:[#allocation2 + $0x88] sm:$0xf]
    %v169 = vld [vmem:[#allocation2 + $0x8c] sm:$0xf]
    %v170 = vld [vmem:[#allocation2 + $0x90] sm:$0xf]
    %v171 = vld [vmem:[#allocation2 + $0x94] sm:$0xf]
    %v172 = vld [vmem:[#allocation2 + $0x98] sm:$0xf]
    %v173 = vld [vmem:[#allocation2 + $0x9c] sm:$0xf]
    %v174 = vld [vmem:[#allocation2 + $0xa0] sm:$0xf]
    %v175 = vld [vmem:[#allocation2 + $0xa4] sm:$0xf]
    %v176 = vld [vmem:[#allocation2 + $0xa8] sm:$0xf]
    %v177 = vld [vmem:[#allocation2 + $0xac] sm:$0xf]
    %v178 = vld [vmem:[#allocation2 + $0xb0] sm:$0xf]
    %v179 = vld [vmem:[#allocation2 + $0xb4] sm:$0xf]
    %v180 = vld [vmem:[#allocation2 + $0xb8] sm:$0xf]
    %v181 = vld [vmem:[#allocation2 + $0xbc] sm:$0xf]
    %v182 = vld [vmem:[#allocation2 + $0xc0] sm:$0xf]
    %v183 = vld [vmem:[#allocation2 + $0xc4] sm:$0xf]
    %v184 = vld [vmem:[#allocation2 + $0xc8] sm:$0xf]
    %v185 = vld [vmem:[#allocation2 + $0xcc] sm:$0xf]
    %v186 = vld [vmem:[#allocation2 + $0xd0] sm:$0xf]
    %v187 = vld [vmem:[#allocation2 + $0xd4] sm:$0xf]
    %v188 = vld [vmem:[#allocation2 + $0xd8] sm:$0xf]
    %v189 = vld [vmem:[#allocation2 + $0xdc] sm:$0xf]
    %v190 = vld [vmem:[#allocation2 + $0xe0] sm:$0xf]
    %v191 = vld [vmem:[#allocation2 + $0xe4] sm:$0xf]
    %v192 = vld [vmem:[#allocation2 + $0xe8] sm:$0xf]
    %v193 = vld [vmem:[#allocation2 + $0xec] sm:$0xf]
    %v194 = vld [vmem:[#allocation2 + $0xf0] sm:$0xf]
    %v195 = vld [vmem:[#allocation2 + $0xf4] sm:$0xf]
    %v196 = vld [vmem:[#allocation2 + $0xf8] sm:$0xf]
    %v197 = vld [vmem:[#allocation2 + $0xfc] sm:$0xf]
    %v198 = vld [vmem:[#allocation2 + $0x100] sm:$0xf]
    %v199 = vld [vmem:[#allocation2 + $0x104] sm:$0xf]
    %v200 = vld [vmem:[#allocation2 + $0x108] sm:$0xf]
    %v201 = vld [vmem:[#allocation2 + $0x10c] sm:$0xf]
    %v202 = vld [vmem:[#allocation2 + $0x110] sm:$0xf]
    %v203 = vld [vmem:[#allocation2 + $0x114] sm:$0xf]
    %v204 = vld [vmem:[#allocation2 + $0x118] sm:$0xf]
    %v205 = vld [vmem:[#allocation2 + $0x11c] sm:$0xf]
    %v206 = vld [vmem:[#allocation2 + $0x120] sm:$0xf]
    %v207 = vld [vmem:[#allocation2 + $0x124] sm:$0xf]
    %v208 = vld [vmem:[#allocation2 + $0x128] sm:$0xf]
    %v209 = vld [vmem:[#allocation2 + $0x12c] sm:$0xf]
    %v210 = vld [vmem:[#allocation2 + $0x130] sm:$0xf]
    %v211 = vld [vmem:[#allocation2 + $0x134] sm:$0xf]
    %v212 = vld [vmem:[#allocation2 + $0x138] sm:$0xf]
    %v213 = vld [vmem:[#allocation2 + $0x13c] sm:$0xf]
    %v214 = vld [vmem:[#allocation2 + $0x140] sm:$0xf]
    %v215 = vld [vmem:[#allocation2 + $0x144] sm:$0xf]
    %v216 = vld [vmem:[#allocation2 + $0x148] sm:$0xf]
    %v217 = vld [vmem:[#allocation2 + $0x14c] sm:$0xf]
    %v218 = vld [vmem:[#allocation2 + $0x150] sm:$0xf]
    %v219 = vld [vmem:[#allocation2 + $0x154] sm:$0xf]
    %v220 = vld [vmem:[#allocation2 + $0x158] sm:$0xf]
    %v221 = vld [vmem:[#allocation2 + $0x15c] sm:$0xf]
    %v222 = vld [vmem:[#allocation2 + $0x160] sm:$0xf]
    %v223 = vld [vmem:[#allocation2 + $0x164] sm:$0xf]
    %v224 = vld [vmem:[#allocation2 + $0x168] sm:$0xf]
    %v225 = vld [vmem:[#allocation2 + $0x16c] sm:$0xf]
    %v226 = vld [vmem:[#allocation2 + $0x170] sm:$0xf]
    %v227 = vld [vmem:[#allocation2 + $0x174] sm:$0xf]
    %v228 = vld [vmem:[#allocation2 + $0x178] sm:$0xf]
    %v229 = vld [vmem:[#allocation2 + $0x17c] sm:$0xf]
    %v230 = vld [vmem:[%s2] sm:$0x1]
    %v232 = vlaneseq
    %v233 = vshrl.u32 %v232, 7
    %v234 = vsub.s32 0, %v233
    %v235 = vrot.slane %v230, %v234
    %v333 = vunpack.c.l.b16 %v134
    %v334 = vunpack.c.l.b16 %v135
    %v335 = vunpack.c.l.b16 %v136
    %v336 = vunpack.c.l.b16 %v137
    %v337 = vunpack.c.l.b16 %v138
    %v338 = vunpack.c.l.b16 %v139
    %v339 = vunpack.c.l.b16 %v140
    %v340 = vunpack.c.l.b16 %v141
    %v341 = vunpack.c.l.b16 %v142
    %v342 = vunpack.c.l.b16 %v143
    %v343 = vunpack.c.l.b16 %v144
    %v344 = vunpack.c.l.b16 %v145
    %v345 = vunpack.c.l.b16 %v146
    %v346 = vunpack.c.l.b16 %v147
    %v347 = vunpack.c.l.b16 %v148
    %v348 = vunpack.c.l.b16 %v149
    %v349 = vunpack.c.l.b16 %v150
    %v350 = vunpack.c.l.b16 %v151
    %v351 = vunpack.c.l.b16 %v152
    %v352 = vunpack.c.l.b16 %v153
    %v353 = vunpack.c.l.b16 %v154
    %v354 = vunpack.c.l.b16 %v155
    %v355 = vunpack.c.l.b16 %v156
    %v356 = vunpack.c.l.b16 %v157
    %v357 = vunpack.c.l.b16 %v158
    %v358 = vunpack.c.l.b16 %v159
    %v359 = vunpack.c.l.b16 %v160
    %v360 = vunpack.c.l.b16 %v161
    %v361 = vunpack.c.l.b16 %v162
    %v362 = vunpack.c.l.b16 %v163
    %v363 = vunpack.c.l.b16 %v164
    %v364 = vunpack.c.l.b16 %v165
    %v365 = vunpack.c.l.b16 %v166
    %v366 = vunpack.c.l.b16 %v167
    %v367 = vunpack.c.l.b16 %v168
    %v368 = vunpack.c.l.b16 %v169
    %v369 = vunpack.c.l.b16 %v170
    %v370 = vunpack.c.l.b16 %v171
    %v371 = vunpack.c.l.b16 %v172
    %v372 = vunpack.c.l.b16 %v173
    %v373 = vunpack.c.l.b16 %v174
    %v374 = vunpack.c.l.b16 %v175
    %v375 = vunpack.c.l.b16 %v176
    %v376 = vunpack.c.l.b16 %v177
    %v377 = vunpack.c.l.b16 %v178
    %v378 = vunpack.c.l.b16 %v179
    %v379 = vunpack.c.l.b16 %v180
    %v380 = vunpack.c.l.b16 %v181
    %v381 = vunpack.c.l.b16 %v182
    %v382 = vunpack.c.l.b16 %v183
    %v383 = vunpack.c.l.b16 %v184
    %v384 = vunpack.c.l.b16 %v185
    %v385 = vunpack.c.l.b16 %v186
    %v386 = vunpack.c.l.b16 %v187
    %v387 = vunpack.c.l.b16 %v188
    %v388 = vunpack.c.l.b16 %v189
    %v389 = vunpack.c.l.b16 %v190
    %v390 = vunpack.c.l.b16 %v191
    %v391 = vunpack.c.l.b16 %v192
    %v392 = vunpack.c.l.b16 %v193
    %v393 = vunpack.c.l.b16 %v194
    %v394 = vunpack.c.l.b16 %v195
    %v395 = vunpack.c.l.b16 %v196
    %v396 = vunpack.c.l.b16 %v197
    %v397 = vunpack.c.l.b16 %v198
    %v398 = vunpack.c.l.b16 %v199
    %v399 = vunpack.c.l.b16 %v200
    %v400 = vunpack.c.l.b16 %v201
    %v401 = vunpack.c.l.b16 %v202
    %v402 = vunpack.c.l.b16 %v203
    %v403 = vunpack.c.l.b16 %v204
    %v404 = vunpack.c.l.b16 %v205
    %v405 = vunpack.c.l.b16 %v206
    %v406 = vunpack.c.l.b16 %v207
    %v407 = vunpack.c.l.b16 %v208
    %v408 = vunpack.c.l.b16 %v209
    %v409 = vunpack.c.l.b16 %v210
    %v410 = vunpack.c.l.b16 %v211
    %v411 = vunpack.c.l.b16 %v212
    %v412 = vunpack.c.l.b16 %v213
    %v413 = vunpack.c.l.b16 %v214
    %v414 = vunpack.c.l.b16 %v215
    %v415 = vunpack.c.l.b16 %v216
    %v416 = vunpack.c.l.b16 %v217
    %v417 = vunpack.c.l.b16 %v218
    %v418 = vunpack.c.l.b16 %v219
    %v419 = vunpack.c.l.b16 %v220
    %v420 = vunpack.c.l.b16 %v221
    %v421 = vunpack.c.l.b16 %v222
    %v422 = vunpack.c.l.b16 %v223
    %v423 = vunpack.c.l.b16 %v224
    %v424 = vunpack.c.l.b16 %v225
    %v425 = vunpack.c.l.b16 %v226
    %v426 = vunpack.c.l.b16 %v227
    %v427 = vunpack.c.l.b16 %v228
    %v428 = vunpack.c.l.b16 %v229
    %v429 = vpack.c.b16 %v334, %v333
    %v430 = vpack.c.b16 %v336, %v335
    %v431 = vpack.c.b16 %v338, %v337
    %v432 = vpack.c.b16 %v340, %v339
    %v433 = vpack.c.b16 %v342, %v341
    %v434 = vpack.c.b16 %v344, %v343
    %v435 = vpack.c.b16 %v346, %v345
    %v436 = vpack.c.b16 %v348, %v347
    %v437 = vpack.c.b16 %v350, %v349
    %v438 = vpack.c.b16 %v352, %v351
    %v439 = vpack.c.b16 %v354, %v353
    %v440 = vpack.c.b16 %v356, %v355
    %v441 = vpack.c.b16 %v358, %v357
    %v442 = vpack.c.b16 %v360, %v359
    %v443 = vpack.c.b16 %v362, %v361
    %v444 = vpack.c.b16 %v364, %v363
    %v445 = vpack.c.b16 %v366, %v365
    %v446 = vpack.c.b16 %v368, %v367
    %v447 = vpack.c.b16 %v370, %v369
    %v448 = vpack.c.b16 %v372, %v371
    %v449 = vpack.c.b16 %v374, %v373
    %v450 = vpack.c.b16 %v376, %v375
    %v451 = vpack.c.b16 %v378, %v377
    %v452 = vpack.c.b16 %v380, %v379
    %v453 = vpack.c.b16 %v382, %v381
    %v454 = vpack.c.b16 %v384, %v383
    %v455 = vpack.c.b16 %v386, %v385
    %v456 = vpack.c.b16 %v388, %v387
    %v457 = vpack.c.b16 %v390, %v389
    %v458 = vpack.c.b16 %v392, %v391
    %v459 = vpack.c.b16 %v394, %v393
    %v460 = vpack.c.b16 %v396, %v395
    %v461 = vpack.c.b16 %v398, %v397
    %v462 = vpack.c.b16 %v400, %v399
    %v463 = vpack.c.b16 %v402, %v401
    %v464 = vpack.c.b16 %v404, %v403
    %v465 = vpack.c.b16 %v406, %v405
    %v466 = vpack.c.b16 %v408, %v407
    %v467 = vpack.c.b16 %v410, %v409
    %v468 = vpack.c.b16 %v412, %v411
    %v469 = vpack.c.b16 %v414, %v413
    %v470 = vpack.c.b16 %v416, %v415
    %v471 = vpack.c.b16 %v418, %v417
    %v472 = vpack.c.b16 %v420, %v419
    %v473 = vpack.c.b16 %v422, %v421
    %v474 = vpack.c.b16 %v424, %v423
    %v475 = vpack.c.b16 %v426, %v425
    %v476 = vpack.c.b16 %v428, %v427
    %525 = vmatprep.subr.bf16.mxu0 0
    %526 = vmatpush1.bf16.msra.mxu0 %v436
    %527 = vmatprep.subr.bf16.mxu0 0
    %528 = vmatpush1.bf16.msra.mxu0 %v435
    %529 = vmatprep.subr.bf16.mxu0 0
    %530 = vmatpush1.bf16.msra.mxu0 %v434
    %531 = vmatprep.subr.bf16.mxu0 0
    %532 = vmatpush1.bf16.msra.mxu0 %v433
    %533 = vmatprep.subr.bf16.mxu0 0
    %534 = vmatpush1.bf16.msra.mxu0 %v432
    %535 = vmatprep.subr.bf16.mxu0 0
    %536 = vmatpush1.bf16.msra.mxu0 %v431
    %537 = vmatprep.subr.bf16.mxu0 0
    %538 = vmatpush1.bf16.msra.mxu0 %v430
    %539 = vmatprep.subr.bf16.mxu0 0
    %540 = vmatpush1.bf16.msra.mxu0 %v429
    %541 = vmatprep.subr.bf16.mxu0 0
    %542 = vmatpush2.bf16.msra.mxu0 %v444
    %543 = vmatprep.subr.bf16.mxu0 0
    %544 = vmatpush2.bf16.msra.mxu0 %v443
    %545 = vmatprep.subr.bf16.mxu0 0
    %546 = vmatpush2.bf16.msra.mxu0 %v442
    %547 = vmatprep.subr.bf16.mxu0 0
    %548 = vmatpush2.bf16.msra.mxu0 %v441
    %549 = vmatprep.subr.bf16.mxu0 0
    %550 = vmatpush2.bf16.msra.mxu0 %v440
    %551 = vmatprep.subr.bf16.mxu0 0
    %552 = vmatpush2.bf16.msra.mxu0 %v439
    %553 = vmatprep.subr.bf16.mxu0 0
    %554 = vmatpush2.bf16.msra.mxu0 %v438
    %555 = vmatprep.subr.bf16.mxu0 0
    %556 = vmatpush2.bf16.msra.mxu0 %v437
    %557 = vmatprep.mubr.bf16.mxu0 %v129
    %558 = vmatmul.mubr.bf16.gmra.mxu0 %v128
    %v559 = vpop.f32.mrf.mxu0
    %v560 = vadd.f32 %v235, %v559
    %v561 = vpop.f32.mrf.mxu0
    %v562 = vpop.f32.mrf.mxu0
    %v563 = vpop.f32.mrf.mxu0
    %564 = vdwg.mxu0
    %565 = vmatprep.subr.bf16.mxu0 0
    %566 = vmatpush1.bf16.msra.mxu0 %v452
    %567 = vmatprep.subr.bf16.mxu0 0
    %568 = vmatpush1.bf16.msra.mxu0 %v451
    %569 = vmatprep.subr.bf16.mxu0 0
    %570 = vmatpush1.bf16.msra.mxu0 %v450
    %571 = vmatprep.subr.bf16.mxu0 0
    %572 = vmatpush1.bf16.msra.mxu0 %v449
    %573 = vmatprep.subr.bf16.mxu0 0
    %574 = vmatpush1.bf16.msra.mxu0 %v448
    %575 = vmatprep.subr.bf16.mxu0 0
    %576 = vmatpush1.bf16.msra.mxu0 %v447
    %577 = vmatprep.subr.bf16.mxu0 0
    %578 = vmatpush1.bf16.msra.mxu0 %v446
    %579 = vmatprep.subr.bf16.mxu0 0
    %580 = vmatpush1.bf16.msra.mxu0 %v445
    %581 = vmatprep.subr.bf16.mxu0 0
    %582 = vmatpush2.bf16.msra.mxu0 %v460
    %583 = vmatprep.subr.bf16.mxu0 0
    %584 = vmatpush2.bf16.msra.mxu0 %v459
    %585 = vmatprep.subr.bf16.mxu0 0
    %586 = vmatpush2.bf16.msra.mxu0 %v458
    %587 = vmatprep.subr.bf16.mxu0 0
    %588 = vmatpush2.bf16.msra.mxu0 %v457
    %589 = vmatprep.subr.bf16.mxu0 0
    %590 = vmatpush2.bf16.msra.mxu0 %v456
    %591 = vmatprep.subr.bf16.mxu0 0
    %592 = vmatpush2.bf16.msra.mxu0 %v455
    %593 = vmatprep.subr.bf16.mxu0 0
    %594 = vmatpush2.bf16.msra.mxu0 %v454
    %595 = vmatprep.subr.bf16.mxu0 0
    %596 = vmatpush2.bf16.msra.mxu0 %v453
    %597 = vmatprep.mubr.bf16.mxu0 %v131
    %598 = vmatmul.mubr.bf16.gmra.mxu0 %v130
    %v599 = vpop.f32.mrf.mxu0
    %v600 = vadd.f32 %v560, %v599
    %v601 = vpop.f32.mrf.mxu0
    %v602 = vpop.f32.mrf.mxu0
    %v603 = vpop.f32.mrf.mxu0
    %604 = vdwg.mxu0
    %605 = vmatprep.subr.bf16.mxu0 0
    %606 = vmatpush1.bf16.msra.mxu0 %v468
    %607 = vmatprep.subr.bf16.mxu0 0
    %608 = vmatpush1.bf16.msra.mxu0 %v467
    %609 = vmatprep.subr.bf16.mxu0 0
    %610 = vmatpush1.bf16.msra.mxu0 %v466
    %611 = vmatprep.subr.bf16.mxu0 0
    %612 = vmatpush1.bf16.msra.mxu0 %v465
    %613 = vmatprep.subr.bf16.mxu0 0
    %614 = vmatpush1.bf16.msra.mxu0 %v464
    %615 = vmatprep.subr.bf16.mxu0 0
    %616 = vmatpush1.bf16.msra.mxu0 %v463
    %617 = vmatprep.subr.bf16.mxu0 0
    %618 = vmatpush1.bf16.msra.mxu0 %v462
    %619 = vmatprep.subr.bf16.mxu0 0
    %620 = vmatpush1.bf16.msra.mxu0 %v461
    %621 = vmatprep.subr.bf16.mxu0 0
    %622 = vmatpush2.bf16.msra.mxu0 %v476
    %623 = vmatprep.subr.bf16.mxu0 0
    %624 = vmatpush2.bf16.msra.mxu0 %v475
    %625 = vmatprep.subr.bf16.mxu0 0
    %626 = vmatpush2.bf16.msra.mxu0 %v474
    %627 = vmatprep.subr.bf16.mxu0 0
    %628 = vmatpush2.bf16.msra.mxu0 %v473
    %629 = vmatprep.subr.bf16.mxu0 0
    %630 = vmatpush2.bf16.msra.mxu0 %v472
    %631 = vmatprep.subr.bf16.mxu0 0
    %632 = vmatpush2.bf16.msra.mxu0 %v471
    %633 = vmatprep.subr.bf16.mxu0 0
    %634 = vmatpush2.bf16.msra.mxu0 %v470
    %635 = vmatprep.subr.bf16.mxu0 0
    %636 = vmatpush2.bf16.msra.mxu0 %v469
    %637 = vmatprep.mubr.bf16.mxu0 %v133
    %638 = vmatmul.mubr.bf16.gmra.mxu0 %v132
    %v639 = vpop.f32.mrf.mxu0
    %v640 = vadd.f32 %v600, %v639
    %v641 = vpop.f32.mrf.mxu0
    %v642 = vpop.f32.mrf.mxu0
    %v643 = vpop.f32.mrf.mxu0
    %644 = vdwg.mxu0
    %v645 = vmax.f32 %v640, 0.0
    %v646 = vpack.c.bf16 %v645, %v645
    %v647 = vld [vmem:[%s3] sm:$0xf]
    %v648 = vld [vmem:[%s3 + $0x4] sm:$0xf]
    %v649 = vld [vmem:[%s3 + $0x8] sm:$0xf]
    %v650 = vld [vmem:[%s3 + $0xc] sm:$0xf]
    %v651 = vld [vmem:[%s3 + $0x10] sm:$0xf]
    %v652 = vld [vmem:[%s3 + $0x14] sm:$0xf]
    %v653 = vld [vmem:[%s3 + $0x18] sm:$0xf]
    %v654 = vld [vmem:[%s3 + $0x1c] sm:$0xf]
    %v655 = vld [vmem:[%s3 + $0x20] sm:$0xf]
    %v656 = vld [vmem:[%s3 + $0x24] sm:$0xf]
    %v657 = vld [vmem:[%s3 + $0x28] sm:$0xf]
    %v658 = vld [vmem:[%s3 + $0x2c] sm:$0xf]
    %v659 = vld [vmem:[%s3 + $0x30] sm:$0xf]
    %v660 = vld [vmem:[%s3 + $0x34] sm:$0xf]
    %v661 = vld [vmem:[%s3 + $0x38] sm:$0xf]
    %v662 = vld [vmem:[%s3 + $0x3c] sm:$0xf]
    %v663 = vld [vmem:[%s4] sm:$0x1]
    %v665 = vlaneseq
    %v666 = vshrl.u32 %v665, 7
    %v667 = vsub.s32 0, %v666
    %v668 = vrot.slane %v663, %v667
    %v686 = vunpack.c.l.b16 %v647
    %v687 = vunpack.c.l.b16 %v648
    %v688 = vunpack.c.l.b16 %v649
    %v689 = vunpack.c.l.b16 %v650
    %v690 = vunpack.c.l.b16 %v651
    %v691 = vunpack.c.l.b16 %v652
    %v692 = vunpack.c.l.b16 %v653
    %v693 = vunpack.c.l.b16 %v654
    %v694 = vunpack.c.l.b16 %v655
    %v695 = vunpack.c.l.b16 %v656
    %v696 = vunpack.c.l.b16 %v657
    %v697 = vunpack.c.l.b16 %v658
    %v698 = vunpack.c.l.b16 %v659
    %v699 = vunpack.c.l.b16 %v660
    %v700 = vunpack.c.l.b16 %v661
    %v701 = vunpack.c.l.b16 %v662
    %v702 = vpack.c.b16 %v687, %v686
    %v703 = vpack.c.b16 %v689, %v688
    %v704 = vpack.c.b16 %v691, %v690
    %v705 = vpack.c.b16 %v693, %v692
    %v706 = vpack.c.b16 %v695, %v694
    %v707 = vpack.c.b16 %v697, %v696
    %v708 = vpack.c.b16 %v699, %v698
    %v709 = vpack.c.b16 %v701, %v700
    %718 = vmatprep.subr.bf16.mxu0 0
    %719 = vmatpush1.bf16.msra.mxu0 %v709
    %720 = vmatprep.subr.bf16.mxu0 0
    %721 = vmatpush1.bf16.msra.mxu0 %v708
    %722 = vmatprep.subr.bf16.mxu0 0
    %723 = vmatpush1.bf16.msra.mxu0 %v707
    %724 = vmatprep.subr.bf16.mxu0 0
    %725 = vmatpush1.bf16.msra.mxu0 %v706
    %726 = vmatprep.subr.bf16.mxu0 0
    %727 = vmatpush1.bf16.msra.mxu0 %v705
    %728 = vmatprep.subr.bf16.mxu0 0
    %729 = vmatpush1.bf16.msra.mxu0 %v704
    %730 = vmatprep.subr.bf16.mxu0 0
    %731 = vmatpush1.bf16.msra.mxu0 %v703
    %732 = vmatprep.subr.bf16.mxu0 0
    %733 = vmatpush1.bf16.msra.mxu0 %v702
    %734 = vmatprep.subr.bf16.mxu0 0
    %735 = vmatpush2.bf16.msra.mxu0 0
    %736 = vmatprep.subr.bf16.mxu0 0
    %737 = vmatpush2.bf16.msra.mxu0 0
    %738 = vmatprep.subr.bf16.mxu0 0
    %739 = vmatpush2.bf16.msra.mxu0 0
    %740 = vmatprep.subr.bf16.mxu0 0
    %741 = vmatpush2.bf16.msra.mxu0 0
    %742 = vmatprep.subr.bf16.mxu0 0
    %743 = vmatpush2.bf16.msra.mxu0 0
    %744 = vmatprep.subr.bf16.mxu0 0
    %745 = vmatpush2.bf16.msra.mxu0 0
    %746 = vmatprep.subr.bf16.mxu0 0
    %747 = vmatpush2.bf16.msra.mxu0 0
    %748 = vmatprep.subr.bf16.mxu0 0
    %749 = vmatpush2.bf16.msra.mxu0 0
    %750 = vmatprep.mubr.bf16.mxu0 0
    %751 = vmatmul.mubr.bf16.gmra.mxu0 %v646
    %v752 = vpop.f32.mrf.mxu0
    %v753 = vadd.f32 %v668, %v752
    %v754 = vpop.f32.mrf.mxu0
    %v755 = vpop.f32.mrf.mxu0
    %v756 = vpop.f32.mrf.mxu0
    %757 = vdwg.mxu0
    %758 = vst [vmem:[#allocation5] sm:$0xff] %v753
    // Predicated region
    $region26: #{_forward_impl.1} parent=1 // pred_check
      _
    $region27: #{_forward_impl.1} parent=1 // pred_check_branch
      %760 = sbr.rel (0) target = $region29
    $region28: #{_forward_impl.1} parent=1 // pred_region
      %s762 = ssub.s32 128, 32
      %763 = vsyncadd [#allocation4], %s762
      %s764 = sshll.u32 [#allocation5], 4
      %s765 = int_to_ptr.vmem [resolvable:$true] %s764
      %770 = dma.vmem_to_hbm [thread:$0]  %s765, 32, %s5, [#allocation4], 32, 32, 2
    $region29: #{_forward_impl.1} parent=1 // pred_fallthru
      _
    // Predicated region
    $region30: #{_forward_impl.1} parent=1 // pred_check
      _
    $region31: #{_forward_impl.1} parent=1 // pred_check_branch
      %772 = sbr.rel (0) target = $region33
    $region32: #{_forward_impl.1} parent=1 // pred_region
      %773 = dma.done [#allocation4], 128
    $region33: #{_forward_impl.1} parent=1 // pred_fallthru
      _
    %774 = vsyncpa [#allocation3], 1
    %775 = vsyncpa [#allocation4], 1

</llo_original>
